<compile_context>
chip_gen: v7x
topology: tpu7x:2x2x1
jax: 0.10.0
libtpu: 0.0.40
codegen_flags: <defaults>
</compile_context>

<pallas_src>
import functools

import jax
import jax.numpy as jnp
from jax.experimental import pallas as pl
from jax.experimental.pallas import tpu as pltpu

F_IN = 373        # raw input feature dim
F_IN_PAD = 384    # padded to a multiple of 128 for clean MXU/lane alignment
H1, H2, H3 = 256, 128, 128
FC_PAD = 128      # fc1/fc2/fc3 widths (64/64/1) padded to 128 lanes
G_PAD = 8         # graph axis padded to a full sublane group
N_ALIGN = 256     # node axis padded to a multiple of 256 (full MXU tiles)


# ----------------------------------------------------------------------------
# Fused kernel: whole forward pass, everything resident in VMEM, bf16 matmuls.
# ----------------------------------------------------------------------------
def _gcn_fused_kernel(a_ref, x_ref, batch_ref,
                      w1_ref, b1_ref, t1_ref,
                      w2_ref, b2_ref, t2_ref,
                      w3_ref, b3_ref, t3_ref,
                      fw1_ref, fb1_ref,
                      fw2_ref, fb2_ref,
                      fw3_ref, fb3_ref,
                      o_ref):
    a_hat = a_ref[...]                                   # (NP, NP) bf16

    def gcn_layer(h_bf16, w_ref, b_ref, t_ref):
        # GCNConv:  relu( Â (h W) + b )  + shift   (BN scale pre-folded into W
        # of the *next* layer; the shift cannot fold exactly through Â).
        hw = jnp.dot(h_bf16, w_ref[...], preferred_element_type=jnp.float32)
        y = jnp.dot(a_hat, hw.astype(jnp.bfloat16),
                    preferred_element_type=jnp.float32) + b_ref[...]
        return (jnp.maximum(y, 0.0) + t_ref[...]).astype(jnp.bfloat16)

    h = gcn_layer(x_ref[...], w1_ref, b1_ref, t1_ref)    # (NP, 256) bf16
    h = gcn_layer(h, w2_ref, b2_ref, t2_ref)             # (NP, 128) bf16
    h = gcn_layer(h, w3_ref, b3_ref, t3_ref)             # (NP, 128) bf16

    # global_add_pool: build the (G_PAD, NP) one-hot in-kernel from `batch`
    # (padded nodes carry batch id -1 so their column is all-zero).
    n_pad = h.shape[0]
    graph_ids = jax.lax.broadcasted_iota(jnp.int32, (G_PAD, n_pad), 0)
    pool = jnp.where(graph_ids == batch_ref[...], 1.0, 0.0).astype(jnp.bfloat16)
    g = jnp.dot(pool, h, preferred_element_type=jnp.float32)      # (G_PAD, 128)

    # fc1 -> ReLU   (bn3 scale was folded into fw1)
    g = jnp.maximum(
        jnp.dot(g.astype(jnp.bfloat16), fw1_ref[...],
                preferred_element_type=jnp.float32) + fb1_ref[...], 0.0)
    # bn4 (scale + shift) is folded into fw2/fb2; dropout(p=0.2) is identity
    # in eval mode.
    # TODO(synk): training-mode dropout would need pltpu.prng_seed/prng_random_bits.
    g = jnp.maximum(
        jnp.dot(g.astype(jnp.bfloat16), fw2_ref[...],
                preferred_element_type=jnp.float32) + fb2_ref[...], 0.0)
    # fc3 -> ReLU   (real logit lives in lane 0 of the padded 128-wide output)
    g = jnp.maximum(
        jnp.dot(g.astype(jnp.bfloat16), fw3_ref[...],
                preferred_element_type=jnp.float32) + fb3_ref[...], 0.0)
    o_ref[...] = g                                        # (G_PAD, 128) lane-dense store


def _vmem_limit_bytes(args, n_pad):
    # Resident footprint: all kernel inputs + output + the live intermediates
    # (hw in f32, two bf16 h buffers at the widest layer, pooling one-hot,
    # FC-head temporaries).  x2 safety factor + 8 MiB headroom, floored at the
    # known-safe 32 MiB and capped below v7x's 64 MiB physical VMEM.
    in_bytes = sum(int(a.size) * a.dtype.itemsize for a in args)
    inter = n_pad * H1 * (4 + 2 + 2) + G_PAD * n_pad * 2 + G_PAD * FC_PAD * 4 * 4
    out_bytes = G_PAD * FC_PAD * 4
    need = 2 * (in_bytes + inter + out_bytes) + (8 << 20)
    return int(min(max(need, 32 << 20), 56 << 20))


def gcn_fused_call(a_hat, x_pad, batch_row, p):
    vmem = pl.BlockSpec(memory_space=pltpu.MemorySpace.VMEM)
    args = (a_hat, x_pad, batch_row,
            p["w1"], p["b1"], p["t1"],
            p["w2"], p["b2"], p["t2"],
            p["w3"], p["b3"], p["t3"],
            p["fw1"], p["fb1"],
            p["fw2"], p["fb2"],
            p["fw3"], p["fb3"])
    return pl.pallas_call(
        _gcn_fused_kernel,
        out_shape=jax.ShapeDtypeStruct((G_PAD, FC_PAD), jnp.float32),
        in_specs=[vmem] * len(args),
        out_specs=vmem,
        compiler_params=pltpu.CompilerParams(
            vmem_limit_bytes=_vmem_limit_bytes(args, a_hat.shape[0])),
    )(*args)


# ----------------------------------------------------------------------------
# Glue: GCNConv normalization  Â = D̂^{-1/2} (A + I) D̂^{-1/2}
# (matches torch_geometric gcn_norm with add_self_loops=True; deg = in-degree;
#  duplicate edges accumulate, matching summed-message semantics).  Padded
#  nodes get zero rows/columns so they never interact with real nodes.
# ----------------------------------------------------------------------------
def build_norm_adj(edge_index, num_nodes, n_pad):
    src, dst = edge_index[0], edge_index[1]
    loop = jnp.arange(num_nodes, dtype=src.dtype)
    src = jnp.concatenate([src, loop])
    dst = jnp.concatenate([dst, loop])
    ones = jnp.ones(src.shape[0], jnp.float32)
    deg = jnp.zeros((n_pad,), jnp.float32).at[dst].add(ones)
    dinv = jnp.where(deg > 0, jax.lax.rsqrt(jnp.maximum(deg, 1e-12)), 0.0)
    w = dinv[dst] * dinv[src]
    return jnp.zeros((n_pad, n_pad), jnp.float32).at[dst, src].add(w)


# ----------------------------------------------------------------------------
# Parameter init (deterministic, shapes from GCN.__init__), eval-BN folded and
# pre-padded / pre-cast to bf16 once at prep time.
# ----------------------------------------------------------------------------
def _glorot(key, shape):
    fan_in, fan_out = shape
    lim = jnp.sqrt(6.0 / (fan_in + fan_out))
    return jax.random.uniform(key, shape, jnp.float32, -lim, lim)


def _linear_init(key, fan_in, fan_out):
    kw, kb = jax.random.split(key)
    lim = 1.0 / jnp.sqrt(jnp.float32(fan_in))
    w = jax.random.uniform(kw, (fan_in, fan_out), jnp.float32, -lim, lim)
    b = jax.random.uniform(kb, (fan_out,), jnp.float32, -lim, lim)
    return w, b


def _bn_eval_affine(gamma, beta, mean, var, eps=1e-5):
    scale = gamma / jnp.sqrt(var + eps)
    shift = beta - mean * scale
    return scale, shift


def _default_bn(n):
    # TODO(synk): real checkpoints must fold their running mean/var here.
    o, z = jnp.ones((n,), jnp.float32), jnp.zeros((n,), jnp.float32)
    return _bn_eval_affine(o, z, z, o)


def _pad2(a, rows, cols):
    return jnp.zeros((rows, cols), jnp.float32).at[:a.shape[0], :a.shape[1]].set(a)


def _row(v, width):
    return jnp.zeros((1, width), jnp.float32).at[0, :v.shape[0]].set(v)


def init_params(key):
    ks = jax.random.split(key, 6)
    bf = jnp.bfloat16

    # raw parameters
    w1 = _glorot(ks[0], (F_IN, H1)); b1 = jnp.zeros((H1,), jnp.float32)
    s1, t1 = _default_bn(H1)
    w2 = _glorot(ks[1], (H1, H2)); b2 = jnp.zeros((H2,), jnp.float32)
    s2, t2 = _default_bn(H2)
    w3 = _glorot(ks[2], (H2, H3)); b3 = jnp.zeros((H3,), jnp.float32)
    s3, t3 = _default_bn(H3)
    fw1, fb1 = _linear_init(ks[3], H3, 64)
    s4, t4 = _default_bn(64)
    fw2, fb2 = _linear_init(ks[4], 64, 64)
    fw3, fb3 = _linear_init(ks[5], 64, 1)

    # Fold eval-BN scales into the next layer's weights (exact).  bn4 folds
    # fully (scale + shift) into fc2 since no Â / pooling sits in between.
    w2 = s1[:, None] * w2
    w3 = s2[:, None] * w3
    fw1 = s3[:, None] * fw1
    fb2 = fb2 + t4 @ fw2
    fw2 = s4[:, None] * fw2

    p = {}
    p["w1"] = _pad2(w1, F_IN_PAD, H1).astype(bf)          # K padded 373 -> 384
    p["b1"], p["t1"] = _row(b1, H1), _row(t1, H1)
    p["w2"] = w2.astype(bf)
    p["b2"], p["t2"] = _row(b2, H2), _row(t2, H2)
    p["w3"] = w3.astype(bf)
    p["b3"], p["t3"] = _row(b3, H3), _row(t3, H3)
    p["fw1"] = _pad2(fw1, H3, FC_PAD).astype(bf)
    p["fb1"] = _row(fb1, FC_PAD)
    p["fw2"] = _pad2(fw2, FC_PAD, FC_PAD).astype(bf)
    p["fb2"] = _row(fb2, FC_PAD)
    p["fw3"] = _pad2(fw3, FC_PAD, FC_PAD).astype(bf)
    p["fb3"] = _row(fb3, FC_PAD)
    return p


# ----------------------------------------------------------------------------
# Full forward pass (eval mode), jitted so Â construction fuses with the single
# kernel dispatch.  Node axis padded to a multiple of 256; Â and X fed as bf16.
# ----------------------------------------------------------------------------
@functools.partial(jax.jit, static_argnames=("num_nodes", "num_graphs"))
def gcn_forward(params, x, edge_index, batch, num_nodes, num_graphs):
    n_pad = ((num_nodes + N_ALIGN - 1) // N_ALIGN) * N_ALIGN
    a_hat = build_norm_adj(edge_index, num_nodes, n_pad).astype(jnp.bfloat16)
    x_pad = (jnp.zeros((n_pad, F_IN_PAD), jnp.bfloat16)
             .at[:num_nodes, :x.shape[1]].set(x.astype(jnp.bfloat16)))
    batch_row = (jnp.full((1, n_pad), -1, jnp.int32)
                 .at[0, :num_nodes].set(batch.astype(jnp.int32)))
    out = gcn_fused_call(a_hat, x_pad, batch_row, params)         # (G_PAD, 128)
    return out[:num_graphs, 0]


if __name__ == "__main__":
    key = jax.random.PRNGKey(0)
    kx, ke, kp = jax.random.split(key, 3)

    # Batch several graphs per kernel call (block-diagonal Â).
    NUM_GRAPHS, NODES_PER_GRAPH = 4, 32
    NUM_NODES = NUM_GRAPHS * NODES_PER_GRAPH                      # 128 -> padded to 256
    assert NUM_GRAPHS <= G_PAD

    x = jax.random.normal(kx, (NUM_NODES, F_IN), jnp.float32)
    eks = jax.random.split(ke, NUM_GRAPHS)
    edges = [jax.random.randint(eks[g], (2, 96),
                                g * NODES_PER_GRAPH, (g + 1) * NODES_PER_GRAPH)
             for g in range(NUM_GRAPHS)]                          # edges stay in-graph
    edge_index = jnp.concatenate(edges, axis=1)                   # (2, 384)
    batch = jnp.repeat(jnp.arange(NUM_GRAPHS, dtype=jnp.int32), NODES_PER_GRAPH)

    params = init_params(kp)
    out = gcn_forward(params, x, edge_index, batch, NUM_NODES, NUM_GRAPHS)
    out = jax.block_until_ready(out)
    assert out.shape == (NUM_GRAPHS,) and out.dtype == jnp.float32
    assert bool(jnp.all(jnp.isfinite(out))) and bool(jnp.all(out >= 0.0))
    print("KERNEL_OK")
</pallas_src>

<mosaic_0001>
module attributes {stable_mosaic.version = 11 : i64} {
  func.func private @main(%arg0: i32) attributes {dimension_semantics = [#tpu.dimension_semantics<core_parallel>], iteration_bounds = array<i64: 2>, tpu.core_type = #tpu.core_type<sc_scalar_subcore>, window_params = []} {
    return
  }
}

module attributes {stable_mosaic.version = 11 : i64} {
  func.func private @main(%arg0: i32) attributes {dimension_semantics = [#tpu.dimension_semantics<core_parallel>], iteration_bounds = array<i64: 2>, tpu.core_type = #tpu.core_type<sc_scalar_subcore>, window_params = []} {
    return
  }
}

module attributes {stable_mosaic.version = 11 : i64} {
  func.func @_gcn_fused_kernel(%arg0: memref<256x256xbf16, #tpu.memory_space<vmem>>, %arg1: memref<256x384xbf16, #tpu.memory_space<vmem>>, %arg2: memref<1x256xi32, #tpu.memory_space<vmem>>, %arg3: memref<384x256xbf16, #tpu.memory_space<vmem>>, %arg4: memref<1x256xf32, #tpu.memory_space<vmem>>, %arg5: memref<1x256xf32, #tpu.memory_space<vmem>>, %arg6: memref<256x128xbf16, #tpu.memory_space<vmem>>, %arg7: memref<1x128xf32, #tpu.memory_space<vmem>>, %arg8: memref<1x128xf32, #tpu.memory_space<vmem>>, %arg9: memref<128x128xbf16, #tpu.memory_space<vmem>>, %arg10: memref<1x128xf32, #tpu.memory_space<vmem>>, %arg11: memref<1x128xf32, #tpu.memory_space<vmem>>, %arg12: memref<128x128xbf16, #tpu.memory_space<vmem>>, %arg13: memref<1x128xf32, #tpu.memory_space<vmem>>, %arg14: memref<128x128xbf16, #tpu.memory_space<vmem>>, %arg15: memref<1x128xf32, #tpu.memory_space<vmem>>, %arg16: memref<128x128xbf16, #tpu.memory_space<vmem>>, %arg17: memref<1x128xf32, #tpu.memory_space<vmem>>, %arg18: memref<8x128xf32, #tpu.memory_space<vmem>>) attributes {dimension_semantics = [], scalar_prefetch = 0 : i64, scratch_operands = 0 : i64, tpu.core_type = #tpu.core_type<tc>} {
    %c0 = arith.constant 0 : index
    %c0_0 = arith.constant 0 : index
    %0 = vector.load %arg0[%c0, %c0_0] : memref<256x256xbf16, #tpu.memory_space<vmem>>, vector<256x256xbf16>
    %c0_1 = arith.constant 0 : index
    %c0_2 = arith.constant 0 : index
    %1 = vector.load %arg1[%c0_1, %c0_2] : memref<256x384xbf16, #tpu.memory_space<vmem>>, vector<256x384xbf16>
    %c0_3 = arith.constant 0 : index
    %c0_4 = arith.constant 0 : index
    %2 = vector.load %arg3[%c0_3, %c0_4] : memref<384x256xbf16, #tpu.memory_space<vmem>>, vector<384x256xbf16>
    %cst = arith.constant dense<0.000000e+00> : vector<256x256xf32>
    %3 = tpu.matmul %1, %2, %cst {dimension_numbers = #tpu.dot_dimension_numbers<[1], [0], [0], [1], [0, 0, 1, 1], [], []>} : vector<256x384xbf16>, vector<384x256xbf16>, vector<256x256xf32> -> vector<256x256xf32>
    %4 = arith.truncf %3 : vector<256x256xf32> to vector<256x256xbf16>
    %cst_5 = arith.constant dense<0.000000e+00> : vector<256x256xf32>
    %5 = tpu.matmul %0, %4, %cst_5 {dimension_numbers = #tpu.dot_dimension_numbers<[1], [0], [0], [1], [0, 0, 1, 1], [], []>} : vector<256x256xbf16>, vector<256x256xbf16>, vector<256x256xf32> -> vector<256x256xf32>
    %c0_6 = arith.constant 0 : index
    %c0_7 = arith.constant 0 : index
    %6 = vector.load %arg4[%c0_6, %c0_7] : memref<1x256xf32, #tpu.memory_space<vmem>>, vector<1x256xf32>
    %7 = vector.broadcast %6 : vector<1x256xf32> to vector<256x256xf32>
    %8 = arith.addf %5, %7 : vector<256x256xf32>
    %cst_8 = arith.constant 0.000000e+00 : f32
    %9 = vector.broadcast %cst_8 : f32 to vector<256x256xf32>
    %10 = arith.maximumf %8, %9 : vector<256x256xf32>
    %c0_9 = arith.constant 0 : index
    %c0_10 = arith.constant 0 : index
    %11 = vector.load %arg5[%c0_9, %c0_10] : memref<1x256xf32, #tpu.memory_space<vmem>>, vector<1x256xf32>
    %12 = vector.broadcast %11 : vector<1x256xf32> to vector<256x256xf32>
    %13 = arith.addf %10, %12 : vector<256x256xf32>
    %14 = arith.truncf %13 : vector<256x256xf32> to vector<256x256xbf16>
    %c0_11 = arith.constant 0 : index
    %c0_12 = arith.constant 0 : index
    %15 = vector.load %arg6[%c0_11, %c0_12] : memref<256x128xbf16, #tpu.memory_space<vmem>>, vector<256x128xbf16>
    %cst_13 = arith.constant dense<0.000000e+00> : vector<256x128xf32>
    %16 = tpu.matmul %14, %15, %cst_13 {dimension_numbers = #tpu.dot_dimension_numbers<[1], [0], [0], [1], [0, 0, 1, 1], [], []>} : vector<256x256xbf16>, vector<256x128xbf16>, vector<256x128xf32> -> vector<256x128xf32>
    %17 = arith.truncf %16 : vector<256x128xf32> to vector<256x128xbf16>
    %cst_14 = arith.constant dense<0.000000e+00> : vector<256x128xf32>
    %18 = tpu.matmul %0, %17, %cst_14 {dimension_numbers = #tpu.dot_dimension_numbers<[1], [0], [0], [1], [0, 0, 1, 1], [], []>} : vector<256x256xbf16>, vector<256x128xbf16>, vector<256x128xf32> -> vector<256x128xf32>
    %c0_15 = arith.constant 0 : index
    %c0_16 = arith.constant 0 : index
    %19 = vector.load %arg7[%c0_15, %c0_16] : memref<1x128xf32, #tpu.memory_space<vmem>>, vector<1x128xf32>
    %20 = vector.broadcast %19 : vector<1x128xf32> to vector<256x128xf32>
    %21 = arith.addf %18, %20 : vector<256x128xf32>
    %cst_17 = arith.constant 0.000000e+00 : f32
    %22 = vector.broadcast %cst_17 : f32 to vector<256x128xf32>
    %23 = arith.maximumf %21, %22 : vector<256x128xf32>
    %c0_18 = arith.constant 0 : index
    %c0_19 = arith.constant 0 : index
    %24 = vector.load %arg8[%c0_18, %c0_19] : memref<1x128xf32, #tpu.memory_space<vmem>>, vector<1x128xf32>
    %25 = vector.broadcast %24 : vector<1x128xf32> to vector<256x128xf32>
    %26 = arith.addf %23, %25 : vector<256x128xf32>
    %27 = arith.truncf %26 : vector<256x128xf32> to vector<256x128xbf16>
    %c0_20 = arith.constant 0 : index
    %c0_21 = arith.constant 0 : index
    %28 = vector.load %arg9[%c0_20, %c0_21] : memref<128x128xbf16, #tpu.memory_space<vmem>>, vector<128x128xbf16>
    %cst_22 = arith.constant dense<0.000000e+00> : vector<256x128xf32>
    %29 = tpu.matmul %27, %28, %cst_22 {dimension_numbers = #tpu.dot_dimension_numbers<[1], [0], [0], [1], [0, 0, 1, 1], [], []>} : vector<256x128xbf16>, vector<128x128xbf16>, vector<256x128xf32> -> vector<256x128xf32>
    %30 = arith.truncf %29 : vector<256x128xf32> to vector<256x128xbf16>
    %cst_23 = arith.constant dense<0.000000e+00> : vector<256x128xf32>
    %31 = tpu.matmul %0, %30, %cst_23 {dimension_numbers = #tpu.dot_dimension_numbers<[1], [0], [0], [1], [0, 0, 1, 1], [], []>} : vector<256x256xbf16>, vector<256x128xbf16>, vector<256x128xf32> -> vector<256x128xf32>
    %c0_24 = arith.constant 0 : index
    %c0_25 = arith.constant 0 : index
    %32 = vector.load %arg10[%c0_24, %c0_25] : memref<1x128xf32, #tpu.memory_space<vmem>>, vector<1x128xf32>
    %33 = vector.broadcast %32 : vector<1x128xf32> to vector<256x128xf32>
    %34 = arith.addf %31, %33 : vector<256x128xf32>
    %cst_26 = arith.constant 0.000000e+00 : f32
    %35 = vector.broadcast %cst_26 : f32 to vector<256x128xf32>
    %36 = arith.maximumf %34, %35 : vector<256x128xf32>
    %c0_27 = arith.constant 0 : index
    %c0_28 = arith.constant 0 : index
    %37 = vector.load %arg11[%c0_27, %c0_28] : memref<1x128xf32, #tpu.memory_space<vmem>>, vector<1x128xf32>
    %38 = vector.broadcast %37 : vector<1x128xf32> to vector<256x128xf32>
    %39 = arith.addf %36, %38 : vector<256x128xf32>
    %40 = arith.truncf %39 : vector<256x128xf32> to vector<256x128xbf16>
    %41 = tpu.iota {dimensions = array<i32: 0>} : vector<8x256xi32>
    %c0_29 = arith.constant 0 : index
    %c0_30 = arith.constant 0 : index
    %42 = vector.load %arg2[%c0_29, %c0_30] : memref<1x256xi32, #tpu.memory_space<vmem>>, vector<1x256xi32>
    %43 = vector.broadcast %42 : vector<1x256xi32> to vector<8x256xi32>
    %44 = arith.cmpi eq, %41, %43 : vector<8x256xi32>
    %cst_31 = arith.constant 1.000000e+00 : f32
    %cst_32 = arith.constant 0.000000e+00 : f32
    %45 = vector.broadcast %cst_31 : f32 to vector<8x256xf32>
    %46 = vector.broadcast %cst_32 : f32 to vector<8x256xf32>
    %47 = arith.select %44, %45, %46 : vector<8x256xi1>, vector<8x256xf32>
    %48 = arith.truncf %47 : vector<8x256xf32> to vector<8x256xbf16>
    %cst_33 = arith.constant dense<0.000000e+00> : vector<8x128xf32>
    %49 = tpu.matmul %48, %40, %cst_33 {dimension_numbers = #tpu.dot_dimension_numbers<[1], [0], [0], [1], [0, 0, 1, 1], [], []>} : vector<8x256xbf16>, vector<256x128xbf16>, vector<8x128xf32> -> vector<8x128xf32>
    %50 = arith.truncf %49 : vector<8x128xf32> to vector<8x128xbf16>
    %c0_34 = arith.constant 0 : index
    %c0_35 = arith.constant 0 : index
    %51 = vector.load %arg12[%c0_34, %c0_35] : memref<128x128xbf16, #tpu.memory_space<vmem>>, vector<128x128xbf16>
    %cst_36 = arith.constant dense<0.000000e+00> : vector<8x128xf32>
    %52 = tpu.matmul %50, %51, %cst_36 {dimension_numbers = #tpu.dot_dimension_numbers<[1], [0], [0], [1], [0, 0, 1, 1], [], []>} : vector<8x128xbf16>, vector<128x128xbf16>, vector<8x128xf32> -> vector<8x128xf32>
    %c0_37 = arith.constant 0 : index
    %c0_38 = arith.constant 0 : index
    %53 = vector.load %arg13[%c0_37, %c0_38] : memref<1x128xf32, #tpu.memory_space<vmem>>, vector<1x128xf32>
    %54 = vector.broadcast %53 : vector<1x128xf32> to vector<8x128xf32>
    %55 = arith.addf %52, %54 : vector<8x128xf32>
    %cst_39 = arith.constant 0.000000e+00 : f32
    %56 = vector.broadcast %cst_39 : f32 to vector<8x128xf32>
    %57 = arith.maximumf %55, %56 : vector<8x128xf32>
    %58 = arith.truncf %57 : vector<8x128xf32> to vector<8x128xbf16>
    %c0_40 = arith.constant 0 : index
    %c0_41 = arith.constant 0 : index
    %59 = vector.load %arg14[%c0_40, %c0_41] : memref<128x128xbf16, #tpu.memory_space<vmem>>, vector<128x128xbf16>
    %cst_42 = arith.constant dense<0.000000e+00> : vector<8x128xf32>
    %60 = tpu.matmul %58, %59, %cst_42 {dimension_numbers = #tpu.dot_dimension_numbers<[1], [0], [0], [1], [0, 0, 1, 1], [], []>} : vector<8x128xbf16>, vector<128x128xbf16>, vector<8x128xf32> -> vector<8x128xf32>
    %c0_43 = arith.constant 0 : index
    %c0_44 = arith.constant 0 : index
    %61 = vector.load %arg15[%c0_43, %c0_44] : memref<1x128xf32, #tpu.memory_space<vmem>>, vector<1x128xf32>
    %62 = vector.broadcast %61 : vector<1x128xf32> to vector<8x128xf32>
    %63 = arith.addf %60, %62 : vector<8x128xf32>
    %cst_45 = arith.constant 0.000000e+00 : f32
    %64 = vector.broadcast %cst_45 : f32 to vector<8x128xf32>
    %65 = arith.maximumf %63, %64 : vector<8x128xf32>
    %66 = arith.truncf %65 : vector<8x128xf32> to vector<8x128xbf16>
    %c0_46 = arith.constant 0 : index
    %c0_47 = arith.constant 0 : index
    %67 = vector.load %arg16[%c0_46, %c0_47] : memref<128x128xbf16, #tpu.memory_space<vmem>>, vector<128x128xbf16>
    %cst_48 = arith.constant dense<0.000000e+00> : vector<8x128xf32>
    %68 = tpu.matmul %66, %67, %cst_48 {dimension_numbers = #tpu.dot_dimension_numbers<[1], [0], [0], [1], [0, 0, 1, 1], [], []>} : vector<8x128xbf16>, vector<128x128xbf16>, vector<8x128xf32> -> vector<8x128xf32>
    %c0_49 = arith.constant 0 : index
    %c0_50 = arith.constant 0 : index
    %69 = vector.load %arg17[%c0_49, %c0_50] : memref<1x128xf32, #tpu.memory_space<vmem>>, vector<1x128xf32>
    %70 = vector.broadcast %69 : vector<1x128xf32> to vector<8x128xf32>
    %71 = arith.addf %68, %70 : vector<8x128xf32>
    %cst_51 = arith.constant 0.000000e+00 : f32
    %72 = vector.broadcast %cst_51 : f32 to vector<8x128xf32>
    %73 = arith.maximumf %71, %72 : vector<8x128xf32>
    %c0_52 = arith.constant 0 : index
    %c0_53 = arith.constant 0 : index
    %74 = vector.load %arg18[%c0_52, %c0_53] : memref<8x128xf32, #tpu.memory_space<vmem>>, vector<8x128xf32>
    tpu.vector_store %arg18[%c0_52, %c0_53], %73 {strides = array<i32>} : memref<8x128xf32, #tpu.memory_space<vmem>>, vector<8x128xf32>,
    return
  }
}

</mosaic_0001>

<llo_original>
// kernel: mul.1
$region0: #{mul.1}
  #allocation0 [shape = 's32[1]{0}', space=sflag, size = 0x4, scoped, tag = 'scoped memory for mul.1']
  %s0 = inlined_call_operand.vmem [shape: f32[512], index: 0, kind: input, shape index: {}]
  %s1 = inlined_call_operand.vmem [shape: f32[512], index: 1, kind: input, shape index: {}]
  %s2 = inlined_call_operand.vmem [shape: f32[512], index: 2, kind: output, shape index: {}]
  %v3 = vld [vmem:[%s0] sm:$0xf]
  %v4 = vld [vmem:[%s1] sm:$0xf]
  %5 = xla_tuple %v3, %v4
  %6 = xla_tuple %5
  %v7 = vmul.f32 %v3, %v4
  %8 = xla_tuple %v7
  %9 = vst [vmem:[%s2] sm:$0xf] %v7

// kernel: gcn_forward.1
$region0: #{gcn_forward.1}
  #allocation0 [shape = 'u32[]', space=smem, size = 0x4, offset = 0x4, fixed_abs, tag = 'smem constant byte address 0x4 - core index']
  #allocation1 [shape = 'u32[144,128]{1,0:T(1,128)}', space=vmem, size = 0x12000, scoped, tag = 'internal scratch']
  %s0 = inlined_call_operand.vmem [shape: bf16[256,256], index: 0, kind: input, shape index: {}]
  %s1 = inlined_call_operand.vmem [shape: bf16[256,384], index: 1, kind: input, shape index: {}]
  %s2 = inlined_call_operand.vmem [shape: s32[1,256], index: 2, kind: input, shape index: {}]
  %s3 = inlined_call_operand.vmem [shape: bf16[384,256], index: 3, kind: input, shape index: {}]
  %s4 = inlined_call_operand.vmem [shape: f32[1,256], index: 4, kind: input, shape index: {}]
  %s5 = inlined_call_operand.vmem [shape: f32[1,256], index: 5, kind: input, shape index: {}]
  %s6 = inlined_call_operand.vmem [shape: bf16[256,128], index: 6, kind: input, shape index: {}]
  %s7 = inlined_call_operand.vmem [shape: f32[1,128], index: 7, kind: input, shape index: {}]
  %s8 = inlined_call_operand.vmem [shape: f32[1,128], index: 8, kind: input, shape index: {}]
  %s9 = inlined_call_operand.vmem [shape: bf16[128,128], index: 9, kind: input, shape index: {}]
  %s10 = inlined_call_operand.vmem [shape: f32[1,128], index: 10, kind: input, shape index: {}]
  %s11 = inlined_call_operand.vmem [shape: f32[1,128], index: 11, kind: input, shape index: {}]
  %s12 = inlined_call_operand.vmem [shape: bf16[128,128], index: 12, kind: input, shape index: {}]
  %s13 = inlined_call_operand.vmem [shape: f32[1,128], index: 13, kind: input, shape index: {}]
  %s14 = inlined_call_operand.vmem [shape: bf16[128,128], index: 14, kind: input, shape index: {}]
  %s15 = inlined_call_operand.vmem [shape: f32[1,128], index: 15, kind: input, shape index: {}]
  %s16 = inlined_call_operand.vmem [shape: bf16[128,128], index: 16, kind: input, shape index: {}]
  %s17 = inlined_call_operand.vmem [shape: f32[1,128], index: 17, kind: input, shape index: {}]
  %s18 = inlined_call_operand.vmem [shape: f32[8,128], index: 18, kind: output, shape index: {}]
  %s19 = sld [smem:[#allocation0]]
  $region82: #{gcn_forward.1} parent=0
    _
  %s21 = ssub.s32 1, %s19
  %s22 = scalar_select 0, %s21, %s19
  // Predicated region
  $region2: #{gcn_forward.1} parent=0 // pred_check
    _
  $region3: #{gcn_forward.1} parent=0 // pred_check_branch
    %24 = sbr.rel (0) target = $region5
  $region4: #{gcn_forward.1} parent=0 // pred_region
    _
  $region5: #{gcn_forward.1} parent=0 // pred_fallthru
    _
  // Predicated region
  $region6: #{gcn_forward.1} parent=0 // pred_check
    _
  $region7: #{gcn_forward.1} parent=0 // pred_check_branch
    %26 = sbr.rel (0) target = $region9
  $region8: #{gcn_forward.1} parent=0 // pred_region
    _
  $region9: #{gcn_forward.1} parent=0 // pred_fallthru
    _
  // Predicated region
  $region10: #{gcn_forward.1} parent=0 // pred_check
    _
  $region11: #{gcn_forward.1} parent=0 // pred_check_branch
    %28 = sbr.rel (0) target = $region13
  $region12: #{gcn_forward.1} parent=0 // pred_region
    _
  $region13: #{gcn_forward.1} parent=0 // pred_fallthru
    _
  // Predicated region
  $region14: #{gcn_forward.1} parent=0 // pred_check
    _
  $region15: #{gcn_forward.1} parent=0 // pred_check_branch
    %30 = sbr.rel (0) target = $region17
  $region16: #{gcn_forward.1} parent=0 // pred_region
    _
  $region17: #{gcn_forward.1} parent=0 // pred_fallthru
    _
  // Predicated region
  $region18: #{gcn_forward.1} parent=0 // pred_check
    _
  $region19: #{gcn_forward.1} parent=0 // pred_check_branch
    %32 = sbr.rel (0) target = $region21
  $region20: #{gcn_forward.1} parent=0 // pred_region
    _
  $region21: #{gcn_forward.1} parent=0 // pred_fallthru
    _
  // Predicated region
  $region22: #{gcn_forward.1} parent=0 // pred_check
    _
  $region23: #{gcn_forward.1} parent=0 // pred_check_branch
    %34 = sbr.rel (0) target = $region25
  $region24: #{gcn_forward.1} parent=0 // pred_region
    _
  $region25: #{gcn_forward.1} parent=0 // pred_fallthru
    _
  // Predicated region
  $region26: #{gcn_forward.1} parent=0 // pred_check
    _
  $region27: #{gcn_forward.1} parent=0 // pred_check_branch
    %36 = sbr.rel (0) target = $region29
  $region28: #{gcn_forward.1} parent=0 // pred_region
    _
  $region29: #{gcn_forward.1} parent=0 // pred_fallthru
    _
  // Predicated region
  $region30: #{gcn_forward.1} parent=0 // pred_check
    _
  $region31: #{gcn_forward.1} parent=0 // pred_check_branch
    %38 = sbr.rel (0) target = $region33
  $region32: #{gcn_forward.1} parent=0 // pred_region
    _
  $region33: #{gcn_forward.1} parent=0 // pred_fallthru
    _
  // Predicated region
  $region34: #{gcn_forward.1} parent=0 // pred_check
    _
  $region35: #{gcn_forward.1} parent=0 // pred_check_branch
    %40 = sbr.rel (0) target = $region37
  $region36: #{gcn_forward.1} parent=0 // pred_region
    _
  $region37: #{gcn_forward.1} parent=0 // pred_fallthru
    _
  // Predicated region
  $region38: #{gcn_forward.1} parent=0 // pred_check
    _
  $region39: #{gcn_forward.1} parent=0 // pred_check_branch
    %42 = sbr.rel (0) target = $region41
  $region40: #{gcn_forward.1} parent=0 // pred_region
    _
  $region41: #{gcn_forward.1} parent=0 // pred_fallthru
    _
  // Predicated region
  $region42: #{gcn_forward.1} parent=0 // pred_check
    _
  $region43: #{gcn_forward.1} parent=0 // pred_check_branch
    %44 = sbr.rel (0) target = $region45
  $region44: #{gcn_forward.1} parent=0 // pred_region
    _
  $region45: #{gcn_forward.1} parent=0 // pred_fallthru
    _
  // Predicated region
  $region46: #{gcn_forward.1} parent=0 // pred_check
    _
  $region47: #{gcn_forward.1} parent=0 // pred_check_branch
    %46 = sbr.rel (0) target = $region49
  $region48: #{gcn_forward.1} parent=0 // pred_region
    _
  $region49: #{gcn_forward.1} parent=0 // pred_fallthru
    _
  // Predicated region
  $region50: #{gcn_forward.1} parent=0 // pred_check
    _
  $region51: #{gcn_forward.1} parent=0 // pred_check_branch
    %48 = sbr.rel (0) target = $region53
  $region52: #{gcn_forward.1} parent=0 // pred_region
    _
  $region53: #{gcn_forward.1} parent=0 // pred_fallthru
    _
  // Predicated region
  $region54: #{gcn_forward.1} parent=0 // pred_check
    _
  $region55: #{gcn_forward.1} parent=0 // pred_check_branch
    %50 = sbr.rel (0) target = $region57
  $region56: #{gcn_forward.1} parent=0 // pred_region
    _
  $region57: #{gcn_forward.1} parent=0 // pred_fallthru
    _
  // Predicated region
  $region58: #{gcn_forward.1} parent=0 // pred_check
    _
  $region59: #{gcn_forward.1} parent=0 // pred_check_branch
    %52 = sbr.rel (0) target = $region61
  $region60: #{gcn_forward.1} parent=0 // pred_region
    _
  $region61: #{gcn_forward.1} parent=0 // pred_fallthru
    _
  // Predicated region
  $region62: #{gcn_forward.1} parent=0 // pred_check
    _
  $region63: #{gcn_forward.1} parent=0 // pred_check_branch
    %54 = sbr.rel (0) target = $region65
  $region64: #{gcn_forward.1} parent=0 // pred_region
    _
  $region65: #{gcn_forward.1} parent=0 // pred_fallthru
    _
  // Predicated region
  $region66: #{gcn_forward.1} parent=0 // pred_check
    _
  $region67: #{gcn_forward.1} parent=0 // pred_check_branch
    %56 = sbr.rel (0) target = $region69
  $region68: #{gcn_forward.1} parent=0 // pred_region
    _
  $region69: #{gcn_forward.1} parent=0 // pred_fallthru
    _
  // Predicated region
  $region70: #{gcn_forward.1} parent=0 // pred_check
    _
  $region71: #{gcn_forward.1} parent=0 // pred_check_branch
    %58 = sbr.rel (0) target = $region73
  $region72: #{gcn_forward.1} parent=0 // pred_region
    _
  $region73: #{gcn_forward.1} parent=0 // pred_fallthru
    _
  %v60 = vld [vmem:[%s0] sm:$0xff]
  %v61 = vld [vmem:[%s0 + $0x8] sm:$0xff]
  %v62 = vld [vmem:[%s0 + $0x10] sm:$0xff]
  %v63 = vld [vmem:[%s0 + $0x18] sm:$0xff]
  %v64 = vld [vmem:[%s0 + $0x20] sm:$0xff]
  %v65 = vld [vmem:[%s0 + $0x28] sm:$0xff]
  %v66 = vld [vmem:[%s0 + $0x30] sm:$0xff]
  %v67 = vld [vmem:[%s0 + $0x38] sm:$0xff]
  %v68 = vld [vmem:[%s0 + $0x40] sm:$0xff]
  %v69 = vld [vmem:[%s0 + $0x48] sm:$0xff]
  %v70 = vld [vmem:[%s0 + $0x50] sm:$0xff]
  %v71 = vld [vmem:[%s0 + $0x58] sm:$0xff]
  %v72 = vld [vmem:[%s0 + $0x60] sm:$0xff]
  %v73 = vld [vmem:[%s0 + $0x68] sm:$0xff]
  %v74 = vld [vmem:[%s0 + $0x70] sm:$0xff]
  %v75 = vld [vmem:[%s0 + $0x78] sm:$0xff]
  %v76 = vld [vmem:[%s0 + $0x80] sm:$0xff]
  %v77 = vld [vmem:[%s0 + $0x88] sm:$0xff]
  %v78 = vld [vmem:[%s0 + $0x90] sm:$0xff]
  %v79 = vld [vmem:[%s0 + $0x98] sm:$0xff]
  %v80 = vld [vmem:[%s0 + $0xa0] sm:$0xff]
  %v81 = vld [vmem:[%s0 + $0xa8] sm:$0xff]
  %v82 = vld [vmem:[%s0 + $0xb0] sm:$0xff]
  %v83 = vld [vmem:[%s0 + $0xb8] sm:$0xff]
  %v84 = vld [vmem:[%s0 + $0xc0] sm:$0xff]
  %v85 = vld [vmem:[%s0 + $0xc8] sm:$0xff]
  %v86 = vld [vmem:[%s0 + $0xd0] sm:$0xff]
  %v87 = vld [vmem:[%s0 + $0xd8] sm:$0xff]
  %v88 = vld [vmem:[%s0 + $0xe0] sm:$0xff]
  %v89 = vld [vmem:[%s0 + $0xe8] sm:$0xff]
  %v90 = vld [vmem:[%s0 + $0xf0] sm:$0xff]
  %v91 = vld [vmem:[%s0 + $0xf8] sm:$0xff]
  %v92 = vld [vmem:[%s1] sm:$0xff]
  %v93 = vld [vmem:[%s1 + $0x8] sm:$0xf]
  %v94 = vld [vmem:[%s1 + $0xc] sm:$0xff]
  %v95 = vld [vmem:[%s1 + $0x14] sm:$0xf]
  %v96 = vld [vmem:[%s1 + $0x18] sm:$0xff]
  %v97 = vld [vmem:[%s1 + $0x20] sm:$0xf]
  %v98 = vld [vmem:[%s1 + $0x24] sm:$0xff]
  %v99 = vld [vmem:[%s1 + $0x2c] sm:$0xf]
  %v100 = vld [vmem:[%s1 + $0x30] sm:$0xff]
  %v101 = vld [vmem:[%s1 + $0x38] sm:$0xf]
  %v102 = vld [vmem:[%s1 + $0x3c] sm:$0xff]
  %v103 = vld [vmem:[%s1 + $0x44] sm:$0xf]
  %v104 = vld [vmem:[%s1 + $0x48] sm:$0xff]
  %v105 = vld [vmem:[%s1 + $0x50] sm:$0xf]
  %v106 = vld [vmem:[%s1 + $0x54] sm:$0xff]
  %v107 = vld [vmem:[%s1 + $0x5c] sm:$0xf]
  %v108 = vld [vmem:[%s1 + $0x60] sm:$0xff]
  %v109 = vld [vmem:[%s1 + $0x68] sm:$0xf]
  %v110 = vld [vmem:[%s1 + $0x6c] sm:$0xff]
  %v111 = vld [vmem:[%s1 + $0x74] sm:$0xf]
  %v112 = vld [vmem:[%s1 + $0x78] sm:$0xff]
  %v113 = vld [vmem:[%s1 + $0x80] sm:$0xf]
  %v114 = vld [vmem:[%s1 + $0x84] sm:$0xff]
  %v115 = vld [vmem:[%s1 + $0x8c] sm:$0xf]
  %v116 = vld [vmem:[%s1 + $0x90] sm:$0xff]
  %v117 = vld [vmem:[%s1 + $0x98] sm:$0xf]
  %v118 = vld [vmem:[%s1 + $0x9c] sm:$0xff]
  %v119 = vld [vmem:[%s1 + $0xa4] sm:$0xf]
  %v120 = vld [vmem:[%s1 + $0xa8] sm:$0xff]
  %v121 = vld [vmem:[%s1 + $0xb0] sm:$0xf]
  %v122 = vld [vmem:[%s1 + $0xb4] sm:$0xff]
  %v123 = vld [vmem:[%s1 + $0xbc] sm:$0xf]
  %v124 = vld [vmem:[%s1 + $0xc0] sm:$0xff]
  %v125 = vld [vmem:[%s1 + $0xc8] sm:$0xf]
  %v126 = vld [vmem:[%s1 + $0xcc] sm:$0xff]
  %v127 = vld [vmem:[%s1 + $0xd4] sm:$0xf]
  %v128 = vld [vmem:[%s1 + $0xd8] sm:$0xff]
  %v129 = vld [vmem:[%s1 + $0xe0] sm:$0xf]
  %v130 = vld [vmem:[%s1 + $0xe4] sm:$0xff]
  %v131 = vld [vmem:[%s1 + $0xec] sm:$0xf]
  %v132 = vld [vmem:[%s1 + $0xf0] sm:$0xff]
  %v133 = vld [vmem:[%s1 + $0xf8] sm:$0xf]
  %v134 = vld [vmem:[%s1 + $0xfc] sm:$0xff]
  %v135 = vld [vmem:[%s1 + $0x104] sm:$0xf]
  %v136 = vld [vmem:[%s1 + $0x108] sm:$0xff]
  %v137 = vld [vmem:[%s1 + $0x110] sm:$0xf]
  %v138 = vld [vmem:[%s1 + $0x114] sm:$0xff]
  %v139 = vld [vmem:[%s1 + $0x11c] sm:$0xf]
  %v140 = vld [vmem:[%s1 + $0x120] sm:$0xff]
  %v141 = vld [vmem:[%s1 + $0x128] sm:$0xf]
  %v142 = vld [vmem:[%s1 + $0x12c] sm:$0xff]
  %v143 = vld [vmem:[%s1 + $0x134] sm:$0xf]
  %v144 = vld [vmem:[%s1 + $0x138] sm:$0xff]
  %v145 = vld [vmem:[%s1 + $0x140] sm:$0xf]
  %v146 = vld [vmem:[%s1 + $0x144] sm:$0xff]
  %v147 = vld [vmem:[%s1 + $0x14c] sm:$0xf]
  %v148 = vld [vmem:[%s1 + $0x150] sm:$0xff]
  %v149 = vld [vmem:[%s1 + $0x158] sm:$0xf]
  %v150 = vld [vmem:[%s1 + $0x15c] sm:$0xff]
  %v151 = vld [vmem:[%s1 + $0x164] sm:$0xf]
  %v152 = vld [vmem:[%s1 + $0x168] sm:$0xff]
  %v153 = vld [vmem:[%s1 + $0x170] sm:$0xf]
  %v154 = vld [vmem:[%s1 + $0x174] sm:$0xff]
  %v155 = vld [vmem:[%s1 + $0x17c] sm:$0xf]
  %v156 = vld [vmem:[%s3] sm:$0xff]
  %v157 = vld [vmem:[%s3 + $0x8] sm:$0xff]
  %v158 = vld [vmem:[%s3 + $0x10] sm:$0xff]
  %v159 = vld [vmem:[%s3 + $0x18] sm:$0xff]
  %v160 = vld [vmem:[%s3 + $0x20] sm:$0xff]
  %v161 = vld [vmem:[%s3 + $0x28] sm:$0xff]
  %v162 = vld [vmem:[%s3 + $0x30] sm:$0xff]
  %v163 = vld [vmem:[%s3 + $0x38] sm:$0xff]
  %v164 = vld [vmem:[%s3 + $0x40] sm:$0xff]
  %v165 = vld [vmem:[%s3 + $0x48] sm:$0xff]
  %v166 = vld [vmem:[%s3 + $0x50] sm:$0xff]
  %v167 = vld [vmem:[%s3 + $0x58] sm:$0xff]
  %v168 = vld [vmem:[%s3 + $0x60] sm:$0xff]
  %v169 = vld [vmem:[%s3 + $0x68] sm:$0xff]
  %v170 = vld [vmem:[%s3 + $0x70] sm:$0xff]
  %v171 = vld [vmem:[%s3 + $0x78] sm:$0xff]
  %v172 = vld [vmem:[%s3 + $0x80] sm:$0xff]
  %v173 = vld [vmem:[%s3 + $0x88] sm:$0xff]
  %v174 = vld [vmem:[%s3 + $0x90] sm:$0xff]
  %v175 = vld [vmem:[%s3 + $0x98] sm:$0xff]
  %v176 = vld [vmem:[%s3 + $0xa0] sm:$0xff]
  %v177 = vld [vmem:[%s3 + $0xa8] sm:$0xff]
  %v178 = vld [vmem:[%s3 + $0xb0] sm:$0xff]
  %v179 = vld [vmem:[%s3 + $0xb8] sm:$0xff]
  %v180 = vld [vmem:[%s3 + $0xc0] sm:$0xff]
  %v181 = vld [vmem:[%s3 + $0xc8] sm:$0xff]
  %v182 = vld [vmem:[%s3 + $0xd0] sm:$0xff]
  %v183 = vld [vmem:[%s3 + $0xd8] sm:$0xff]
  %v184 = vld [vmem:[%s3 + $0xe0] sm:$0xff]
  %v185 = vld [vmem:[%s3 + $0xe8] sm:$0xff]
  %v186 = vld [vmem:[%s3 + $0xf0] sm:$0xff]
  %v187 = vld [vmem:[%s3 + $0xf8] sm:$0xff]
  %v188 = vld [vmem:[%s3 + $0x100] sm:$0xff]
  %v189 = vld [vmem:[%s3 + $0x108] sm:$0xff]
  %v190 = vld [vmem:[%s3 + $0x110] sm:$0xff]
  %v191 = vld [vmem:[%s3 + $0x118] sm:$0xff]
  %v192 = vld [vmem:[%s3 + $0x120] sm:$0xff]
  %v193 = vld [vmem:[%s3 + $0x128] sm:$0xff]
  %v194 = vld [vmem:[%s3 + $0x130] sm:$0xff]
  %v195 = vld [vmem:[%s3 + $0x138] sm:$0xff]
  %v196 = vld [vmem:[%s3 + $0x140] sm:$0xff]
  %v197 = vld [vmem:[%s3 + $0x148] sm:$0xff]
  %v198 = vld [vmem:[%s3 + $0x150] sm:$0xff]
  %v199 = vld [vmem:[%s3 + $0x158] sm:$0xff]
  %v200 = vld [vmem:[%s3 + $0x160] sm:$0xff]
  %v201 = vld [vmem:[%s3 + $0x168] sm:$0xff]
  %v202 = vld [vmem:[%s3 + $0x170] sm:$0xff]
  %v203 = vld [vmem:[%s3 + $0x178] sm:$0xff]
  %v268 = vunpack.c.l.b16 %v92
  %v269 = vunpack.c.h.b16 %v92
  %v270 = vunpack.c.l.b16 %v93
  %v271 = vunpack.c.l.b16 %v94
  %v272 = vunpack.c.h.b16 %v94
  %v273 = vunpack.c.l.b16 %v95
  %v274 = vunpack.c.l.b16 %v96
  %v275 = vunpack.c.h.b16 %v96
  %v276 = vunpack.c.l.b16 %v97
  %v277 = vunpack.c.l.b16 %v98
  %v278 = vunpack.c.h.b16 %v98
  %v279 = vunpack.c.l.b16 %v99
  %v280 = vunpack.c.l.b16 %v100
  %v281 = vunpack.c.h.b16 %v100
  %v282 = vunpack.c.l.b16 %v101
  %v283 = vunpack.c.l.b16 %v102
  %v284 = vunpack.c.h.b16 %v102
  %v285 = vunpack.c.l.b16 %v103
  %v286 = vunpack.c.l.b16 %v104
  %v287 = vunpack.c.h.b16 %v104
  %v288 = vunpack.c.l.b16 %v105
  %v289 = vunpack.c.l.b16 %v106
  %v290 = vunpack.c.h.b16 %v106
  %v291 = vunpack.c.l.b16 %v107
  %v292 = vunpack.c.l.b16 %v108
  %v293 = vunpack.c.h.b16 %v108
  %v294 = vunpack.c.l.b16 %v109
  %v295 = vunpack.c.l.b16 %v110
  %v296 = vunpack.c.h.b16 %v110
  %v297 = vunpack.c.l.b16 %v111
  %v298 = vunpack.c.l.b16 %v112
  %v299 = vunpack.c.h.b16 %v112
  %v300 = vunpack.c.l.b16 %v113
  %v301 = vunpack.c.l.b16 %v114
  %v302 = vunpack.c.h.b16 %v114
  %v303 = vunpack.c.l.b16 %v115
  %v304 = vunpack.c.l.b16 %v116
  %v305 = vunpack.c.h.b16 %v116
  %v306 = vunpack.c.l.b16 %v117
  %v307 = vunpack.c.l.b16 %v118
  %v308 = vunpack.c.h.b16 %v118
  %v309 = vunpack.c.l.b16 %v119
  %v310 = vunpack.c.l.b16 %v120
  %v311 = vunpack.c.h.b16 %v120
  %v312 = vunpack.c.l.b16 %v121
  %v313 = vunpack.c.l.b16 %v122
  %v314 = vunpack.c.h.b16 %v122
  %v315 = vunpack.c.l.b16 %v123
  %v316 = vunpack.c.l.b16 %v124
  %v317 = vunpack.c.h.b16 %v124
  %v318 = vunpack.c.l.b16 %v125
  %v319 = vunpack.c.l.b16 %v126
  %v320 = vunpack.c.h.b16 %v126
  %v321 = vunpack.c.l.b16 %v127
  %v322 = vunpack.c.l.b16 %v128
  %v323 = vunpack.c.h.b16 %v128
  %v324 = vunpack.c.l.b16 %v129
  %v325 = vunpack.c.l.b16 %v130
  %v326 = vunpack.c.h.b16 %v130
  %v327 = vunpack.c.l.b16 %v131
  %v328 = vunpack.c.l.b16 %v132
  %v329 = vunpack.c.h.b16 %v132
  %v330 = vunpack.c.l.b16 %v133
  %v331 = vunpack.c.l.b16 %v134
  %v332 = vunpack.c.h.b16 %v134
  %v333 = vunpack.c.l.b16 %v135
  %v334 = vunpack.c.l.b16 %v136
  %v335 = vunpack.c.h.b16 %v136
  %v336 = vunpack.c.l.b16 %v137
  %v337 = vunpack.c.l.b16 %v138
  %v338 = vunpack.c.h.b16 %v138
  %v339 = vunpack.c.l.b16 %v139
  %v340 = vunpack.c.l.b16 %v140
  %v341 = vunpack.c.h.b16 %v140
  %v342 = vunpack.c.l.b16 %v141
  %v343 = vunpack.c.l.b16 %v142
  %v344 = vunpack.c.h.b16 %v142
  %v345 = vunpack.c.l.b16 %v143
  %v346 = vunpack.c.l.b16 %v144
  %v347 = vunpack.c.h.b16 %v144
  %v348 = vunpack.c.l.b16 %v145
  %v349 = vunpack.c.l.b16 %v146
  %v350 = vunpack.c.h.b16 %v146
  %v351 = vunpack.c.l.b16 %v147
  %v352 = vunpack.c.l.b16 %v148
  %v353 = vunpack.c.h.b16 %v148
  %v354 = vunpack.c.l.b16 %v149
  %v355 = vunpack.c.l.b16 %v150
  %v356 = vunpack.c.h.b16 %v150
  %v357 = vunpack.c.l.b16 %v151
  %v358 = vunpack.c.l.b16 %v152
  %v359 = vunpack.c.h.b16 %v152
  %v360 = vunpack.c.l.b16 %v153
  %v361 = vunpack.c.l.b16 %v154
  %v362 = vunpack.c.h.b16 %v154
  %v363 = vunpack.c.l.b16 %v155
  %v364 = vpack.c.b16 %v271, %v268
  %v365 = vpack.c.b16 %v272, %v269
  %v366 = vpack.c.b16 %v273, %v270
  %v367 = vpack.c.b16 %v277, %v274
  %v368 = vpack.c.b16 %v278, %v275
  %v369 = vpack.c.b16 %v279, %v276
  %v370 = vpack.c.b16 %v283, %v280
  %v371 = vpack.c.b16 %v284, %v281
  %v372 = vpack.c.b16 %v285, %v282
  %v373 = vpack.c.b16 %v289, %v286
  %v374 = vpack.c.b16 %v290, %v287
  %v375 = vpack.c.b16 %v291, %v288
  %v376 = vpack.c.b16 %v295, %v292
  %v377 = vpack.c.b16 %v296, %v293
  %v378 = vpack.c.b16 %v297, %v294
  %v379 = vpack.c.b16 %v301, %v298
  %v380 = vpack.c.b16 %v302, %v299
  %v381 = vpack.c.b16 %v303, %v300
  %v382 = vpack.c.b16 %v307, %v304
  %v383 = vpack.c.b16 %v308, %v305
  %v384 = vpack.c.b16 %v309, %v306
  %v385 = vpack.c.b16 %v313, %v310
  %v386 = vpack.c.b16 %v314, %v311
  %v387 = vpack.c.b16 %v315, %v312
  %v388 = vpack.c.b16 %v319, %v316
  %v389 = vpack.c.b16 %v320, %v317
  %v390 = vpack.c.b16 %v321, %v318
  %v391 = vpack.c.b16 %v325, %v322
  %v392 = vpack.c.b16 %v326, %v323
  %v393 = vpack.c.b16 %v327, %v324
  %v394 = vpack.c.b16 %v331, %v328
  %v395 = vpack.c.b16 %v332, %v329
  %v396 = vpack.c.b16 %v333, %v330
  %v397 = vpack.c.b16 %v337, %v334
  %v398 = vpack.c.b16 %v338, %v335
  %v399 = vpack.c.b16 %v339, %v336
  %v400 = vpack.c.b16 %v343, %v340
  %v401 = vpack.c.b16 %v344, %v341
  %v402 = vpack.c.b16 %v345, %v342
  %v403 = vpack.c.b16 %v349, %v346
  %v404 = vpack.c.b16 %v350, %v347
  %v405 = vpack.c.b16 %v351, %v348
  %v406 = vpack.c.b16 %v355, %v352
  %v407 = vpack.c.b16 %v356, %v353
  %v408 = vpack.c.b16 %v357, %v354
  %v409 = vpack.c.b16 %v361, %v358
  %v410 = vpack.c.b16 %v362, %v359
  %v411 = vpack.c.b16 %v363, %v360
  %v508 = vunpack.c.l.b16 %v156
  %v509 = vunpack.c.h.b16 %v156
  %v510 = vunpack.c.l.b16 %v157
  %v511 = vunpack.c.h.b16 %v157
  %v512 = vunpack.c.l.b16 %v158
  %v513 = vunpack.c.h.b16 %v158
  %v514 = vunpack.c.l.b16 %v159
  %v515 = vunpack.c.h.b16 %v159
  %v516 = vunpack.c.l.b16 %v160
  %v517 = vunpack.c.h.b16 %v160
  %v518 = vunpack.c.l.b16 %v161
  %v519 = vunpack.c.h.b16 %v161
  %v520 = vunpack.c.l.b16 %v162
  %v521 = vunpack.c.h.b16 %v162
  %v522 = vunpack.c.l.b16 %v163
  %v523 = vunpack.c.h.b16 %v163
  %v524 = vunpack.c.l.b16 %v164
  %v525 = vunpack.c.h.b16 %v164
  %v526 = vunpack.c.l.b16 %v165
  %v527 = vunpack.c.h.b16 %v165
  %v528 = vunpack.c.l.b16 %v166
  %v529 = vunpack.c.h.b16 %v166
  %v530 = vunpack.c.l.b16 %v167
  %v531 = vunpack.c.h.b16 %v167
  %v532 = vunpack.c.l.b16 %v168
  %v533 = vunpack.c.h.b16 %v168
  %v534 = vunpack.c.l.b16 %v169
  %v535 = vunpack.c.h.b16 %v169
  %v536 = vunpack.c.l.b16 %v170
  %v537 = vunpack.c.h.b16 %v170
  %v538 = vunpack.c.l.b16 %v171
  %v539 = vunpack.c.h.b16 %v171
  %v540 = vunpack.c.l.b16 %v172
  %v541 = vunpack.c.h.b16 %v172
  %v542 = vunpack.c.l.b16 %v173
  %v543 = vunpack.c.h.b16 %v173
  %v544 = vunpack.c.l.b16 %v174
  %v545 = vunpack.c.h.b16 %v174
  %v546 = vunpack.c.l.b16 %v175
  %v547 = vunpack.c.h.b16 %v175
  %v548 = vunpack.c.l.b16 %v176
  %v549 = vunpack.c.h.b16 %v176
  %v550 = vunpack.c.l.b16 %v177
  %v551 = vunpack.c.h.b16 %v177
  %v552 = vunpack.c.l.b16 %v178
  %v553 = vunpack.c.h.b16 %v178
  %v554 = vunpack.c.l.b16 %v179
  %v555 = vunpack.c.h.b16 %v179
  %v556 = vunpack.c.l.b16 %v180
  %v557 = vunpack.c.h.b16 %v180
  %v558 = vunpack.c.l.b16 %v181
  %v559 = vunpack.c.h.b16 %v181
  %v560 = vunpack.c.l.b16 %v182
  %v561 = vunpack.c.h.b16 %v182
  %v562 = vunpack.c.l.b16 %v183
  %v563 = vunpack.c.h.b16 %v183
  %v564 = vunpack.c.l.b16 %v184
  %v565 = vunpack.c.h.b16 %v184
  %v566 = vunpack.c.l.b16 %v185
  %v567 = vunpack.c.h.b16 %v185
  %v568 = vunpack.c.l.b16 %v186
  %v569 = vunpack.c.h.b16 %v186
  %v570 = vunpack.c.l.b16 %v187
  %v571 = vunpack.c.h.b16 %v187
  %v572 = vunpack.c.l.b16 %v188
  %v573 = vunpack.c.h.b16 %v188
  %v574 = vunpack.c.l.b16 %v189
  %v575 = vunpack.c.h.b16 %v189
  %v576 = vunpack.c.l.b16 %v190
  %v577 = vunpack.c.h.b16 %v190
  %v578 = vunpack.c.l.b16 %v191
  %v579 = vunpack.c.h.b16 %v191
  %v580 = vunpack.c.l.b16 %v192
  %v581 = vunpack.c.h.b16 %v192
  %v582 = vunpack.c.l.b16 %v193
  %v583 = vunpack.c.h.b16 %v193
  %v584 = vunpack.c.l.b16 %v194
  %v585 = vunpack.c.h.b16 %v194
  %v586 = vunpack.c.l.b16 %v195
  %v587 = vunpack.c.h.b16 %v195
  %v588 = vunpack.c.l.b16 %v196
  %v589 = vunpack.c.h.b16 %v196
  %v590 = vunpack.c.l.b16 %v197
  %v591 = vunpack.c.h.b16 %v197
  %v592 = vunpack.c.l.b16 %v198
  %v593 = vunpack.c.h.b16 %v198
  %v594 = vunpack.c.l.b16 %v199
  %v595 = vunpack.c.h.b16 %v199
  %v596 = vunpack.c.l.b16 %v200
  %v597 = vunpack.c.h.b16 %v200
  %v598 = vunpack.c.l.b16 %v201
  %v599 = vunpack.c.h.b16 %v201
  %v600 = vunpack.c.l.b16 %v202
  %v601 = vunpack.c.h.b16 %v202
  %v602 = vunpack.c.l.b16 %v203
  %v603 = vunpack.c.h.b16 %v203
  %v604 = vpack.c.b16 %v510, %v508
  %v605 = vpack.c.b16 %v511, %v509
  %v606 = vpack.c.b16 %v514, %v512
  %v607 = vpack.c.b16 %v515, %v513
  %v608 = vpack.c.b16 %v518, %v516
  %v609 = vpack.c.b16 %v519, %v517
  %v610 = vpack.c.b16 %v522, %v520
  %v611 = vpack.c.b16 %v523, %v521
  %v612 = vpack.c.b16 %v526, %v524
  %v613 = vpack.c.b16 %v527, %v525
  %v614 = vpack.c.b16 %v530, %v528
  %v615 = vpack.c.b16 %v531, %v529
  %v616 = vpack.c.b16 %v534, %v532
  %v617 = vpack.c.b16 %v535, %v533
  %v618 = vpack.c.b16 %v538, %v536
  %v619 = vpack.c.b16 %v539, %v537
  %v620 = vpack.c.b16 %v542, %v540
  %v621 = vpack.c.b16 %v543, %v541
  %v622 = vpack.c.b16 %v546, %v544
  %v623 = vpack.c.b16 %v547, %v545
  %v624 = vpack.c.b16 %v550, %v548
  %v625 = vpack.c.b16 %v551, %v549
  %v626 = vpack.c.b16 %v554, %v552
  %v627 = vpack.c.b16 %v555, %v553
  %v628 = vpack.c.b16 %v558, %v556
  %v629 = vpack.c.b16 %v559, %v557
  %v630 = vpack.c.b16 %v562, %v560
  %v631 = vpack.c.b16 %v563, %v561
  %v632 = vpack.c.b16 %v566, %v564
  %v633 = vpack.c.b16 %v567, %v565
  %v634 = vpack.c.b16 %v570, %v568
  %v635 = vpack.c.b16 %v571, %v569
  %v636 = vpack.c.b16 %v574, %v572
  %v637 = vpack.c.b16 %v575, %v573
  %v638 = vpack.c.b16 %v578, %v576
  %v639 = vpack.c.b16 %v579, %v577
  %v640 = vpack.c.b16 %v582, %v580
  %v641 = vpack.c.b16 %v583, %v581
  %v642 = vpack.c.b16 %v586, %v584
  %v643 = vpack.c.b16 %v587, %v585
  %v644 = vpack.c.b16 %v590, %v588
  %v645 = vpack.c.b16 %v591, %v589
  %v646 = vpack.c.b16 %v594, %v592
  %v647 = vpack.c.b16 %v595, %v593
  %v648 = vpack.c.b16 %v598, %v596
  %v649 = vpack.c.b16 %v599, %v597
  %v650 = vpack.c.b16 %v602, %v600
  %v651 = vpack.c.b16 %v603, %v601
  %700 = vmatprep.subr.bf16.mxu0 %v605
  %701 = vmatpush1.bf16.msra.mxu0 %v604
  %702 = vmatprep.subr.bf16.mxu0 %v607
  %703 = vmatpush1.bf16.msra.mxu0 %v606
  %704 = vmatprep.subr.bf16.mxu0 %v609
  %705 = vmatpush1.bf16.msra.mxu0 %v608
  %706 = vmatprep.subr.bf16.mxu0 %v611
  %707 = vmatpush1.bf16.msra.mxu0 %v610
  %708 = vmatprep.subr.bf16.mxu0 %v613
  %709 = vmatpush1.bf16.msra.mxu0 %v612
  %710 = vmatprep.subr.bf16.mxu0 %v615
  %711 = vmatpush1.bf16.msra.mxu0 %v614
  %712 = vmatprep.subr.bf16.mxu0 %v617
  %713 = vmatpush1.bf16.msra.mxu0 %v616
  %714 = vmatprep.subr.bf16.mxu0 %v619
  %715 = vmatpush1.bf16.msra.mxu0 %v618
  %716 = vmatprep.subr.bf16.mxu0 %v621
  %717 = vmatpush1.bf16.msra.mxu0 %v620
  %718 = vmatprep.subr.bf16.mxu0 %v623
  %719 = vmatpush1.bf16.msra.mxu0 %v622
  %720 = vmatprep.subr.bf16.mxu0 %v625
  %721 = vmatpush1.bf16.msra.mxu0 %v624
  %722 = vmatprep.subr.bf16.mxu0 %v627
  %723 = vmatpush1.bf16.msra.mxu0 %v626
  %724 = vmatprep.subr.bf16.mxu0 %v629
  %725 = vmatpush1.bf16.msra.mxu0 %v628
  %726 = vmatprep.subr.bf16.mxu0 %v631
  %727 = vmatpush1.bf16.msra.mxu0 %v630
  %728 = vmatprep.subr.bf16.mxu0 %v633
  %729 = vmatpush1.bf16.msra.mxu0 %v632
  %730 = vmatprep.subr.bf16.mxu0 %v635
  %731 = vmatpush1.bf16.msra.mxu0 %v634
  %732 = vmatprep.mubr.bf16.mxu0 %v365
  %733 = vmatmul.mubr.bf16.gmra.mrb[0].mxu0 %v364
  %v734 = vpop.f32.mrb[0].mxu0
  %v735 = vadd.f32 0.0, %v734
  %v736 = vpop.f32.mrb[0].mxu0
  %v737 = vadd.f32 0.0, %v736
  %v738 = vpop.f32.mrb[0].mxu0
  %v739 = vadd.f32 0.0, %v738
  %v740 = vpop.f32.mrb[0].mxu0
  %v741 = vadd.f32 0.0, %v740
  %742 = vmatprep.mubr.bf16.mxu0 %v368
  %743 = vmatmul.mubr.bf16.gmra.mrb[0].mxu0 %v367
  %v744 = vpop.f32.mrb[0].mxu0
  %v745 = vadd.f32 0.0, %v744
  %v746 = vpop.f32.mrb[0].mxu0
  %v747 = vadd.f32 0.0, %v746
  %v748 = vpop.f32.mrb[0].mxu0
  %v749 = vadd.f32 0.0, %v748
  %v750 = vpop.f32.mrb[0].mxu0
  %v751 = vadd.f32 0.0, %v750
  %752 = vmatprep.mubr.bf16.mxu0 %v371
  %753 = vmatmul.mubr.bf16.gmra.mrb[0].mxu0 %v370
  %v754 = vpop.f32.mrb[0].mxu0
  %v755 = vadd.f32 0.0, %v754
  %v756 = vpop.f32.mrb[0].mxu0
  %v757 = vadd.f32 0.0, %v756
  %v758 = vpop.f32.mrb[0].mxu0
  %v759 = vadd.f32 0.0, %v758
  %v760 = vpop.f32.mrb[0].mxu0
  %v761 = vadd.f32 0.0, %v760
  %762 = vmatprep.mubr.bf16.mxu0 %v374
  %763 = vmatmul.mubr.bf16.gmra.mrb[0].mxu0 %v373
  %v764 = vpop.f32.mrb[0].mxu0
  %v765 = vadd.f32 0.0, %v764
  %v766 = vpop.f32.mrb[0].mxu0
  %v767 = vadd.f32 0.0, %v766
  %v768 = vpop.f32.mrb[0].mxu0
  %v769 = vadd.f32 0.0, %v768
  %v770 = vpop.f32.mrb[0].mxu0
  %v771 = vadd.f32 0.0, %v770
  %772 = vmatprep.mubr.bf16.mxu0 %v377
  %773 = vmatmul.mubr.bf16.gmra.mrb[0].mxu0 %v376
  %v774 = vpop.f32.mrb[0].mxu0
  %v775 = vadd.f32 0.0, %v774
  %v776 = vpop.f32.mrb[0].mxu0
  %v777 = vadd.f32 0.0, %v776
  %v778 = vpop.f32.mrb[0].mxu0
  %v779 = vadd.f32 0.0, %v778
  %v780 = vpop.f32.mrb[0].mxu0
  %v781 = vadd.f32 0.0, %v780
  %782 = vmatprep.mubr.bf16.mxu0 %v380
  %783 = vmatmul.mubr.bf16.gmra.mrb[0].mxu0 %v379
  %v784 = vpop.f32.mrb[0].mxu0
  %v785 = vadd.f32 0.0, %v784
  %v786 = vpop.f32.mrb[0].mxu0
  %v787 = vadd.f32 0.0, %v786
  %v788 = vpop.f32.mrb[0].mxu0
  %v789 = vadd.f32 0.0, %v788
  %v790 = vpop.f32.mrb[0].mxu0
  %v791 = vadd.f32 0.0, %v790
  %792 = vmatprep.mubr.bf16.mxu0 %v383
  %793 = vmatmul.mubr.bf16.gmra.mrb[0].mxu0 %v382
  %v794 = vpop.f32.mrb[0].mxu0
  %v795 = vadd.f32 0.0, %v794
  %v796 = vpop.f32.mrb[0].mxu0
  %v797 = vadd.f32 0.0, %v796
  %v798 = vpop.f32.mrb[0].mxu0
  %v799 = vadd.f32 0.0, %v798
  %v800 = vpop.f32.mrb[0].mxu0
  %v801 = vadd.f32 0.0, %v800
  %802 = vmatprep.mubr.bf16.mxu0 %v386
  %803 = vmatmul.mubr.bf16.gmra.mrb[0].mxu0 %v385
  %v804 = vpop.f32.mrb[0].mxu0
  %v805 = vadd.f32 0.0, %v804
  %v806 = vpop.f32.mrb[0].mxu0
  %v807 = vadd.f32 0.0, %v806
  %v808 = vpop.f32.mrb[0].mxu0
  %v809 = vadd.f32 0.0, %v808
  %v810 = vpop.f32.mrb[0].mxu0
  %v811 = vadd.f32 0.0, %v810
  %812 = vmatprep.mubr.bf16.mxu0 %v389
  %813 = vmatmul.mubr.bf16.gmra.mrb[0].mxu0 %v388
  %v814 = vpop.f32.mrb[0].mxu0
  %v815 = vadd.f32 0.0, %v814
  %v816 = vpop.f32.mrb[0].mxu0
  %v817 = vadd.f32 0.0, %v816
  %v818 = vpop.f32.mrb[0].mxu0
  %v819 = vadd.f32 0.0, %v818
  %v820 = vpop.f32.mrb[0].mxu0
  %v821 = vadd.f32 0.0, %v820
  %822 = vmatprep.mubr.bf16.mxu0 %v392
  %823 = vmatmul.mubr.bf16.gmra.mrb[0].mxu0 %v391
  %v824 = vpop.f32.mrb[0].mxu0
  %v825 = vadd.f32 0.0, %v824
  %v826 = vpop.f32.mrb[0].mxu0
  %v827 = vadd.f32 0.0, %v826
  %v828 = vpop.f32.mrb[0].mxu0
  %v829 = vadd.f32 0.0, %v828
  %v830 = vpop.f32.mrb[0].mxu0
  %v831 = vadd.f32 0.0, %v830
  %832 = vmatprep.mubr.bf16.mxu0 %v395
  %833 = vmatmul.mubr.bf16.gmra.mrb[0].mxu0 %v394
  %v834 = vpop.f32.mrb[0].mxu0
  %v835 = vadd.f32 0.0, %v834
  %v836 = vpop.f32.mrb[0].mxu0
  %v837 = vadd.f32 0.0, %v836
  %v838 = vpop.f32.mrb[0].mxu0
  %v839 = vadd.f32 0.0, %v838
  %v840 = vpop.f32.mrb[0].mxu0
  %v841 = vadd.f32 0.0, %v840
  %842 = vmatprep.mubr.bf16.mxu0 %v398
  %843 = vmatmul.mubr.bf16.gmra.mrb[0].mxu0 %v397
  %v844 = vpop.f32.mrb[0].mxu0
  %v845 = vadd.f32 0.0, %v844
  %v846 = vpop.f32.mrb[0].mxu0
  %v847 = vadd.f32 0.0, %v846
  %v848 = vpop.f32.mrb[0].mxu0
  %v849 = vadd.f32 0.0, %v848
  %v850 = vpop.f32.mrb[0].mxu0
  %v851 = vadd.f32 0.0, %v850
  %852 = vmatprep.mubr.bf16.mxu0 %v401
  %853 = vmatmul.mubr.bf16.gmra.mrb[0].mxu0 %v400
  %v854 = vpop.f32.mrb[0].mxu0
  %v855 = vadd.f32 0.0, %v854
  %v856 = vpop.f32.mrb[0].mxu0
  %v857 = vadd.f32 0.0, %v856
  %v858 = vpop.f32.mrb[0].mxu0
  %v859 = vadd.f32 0.0, %v858
  %v860 = vpop.f32.mrb[0].mxu0
  %v861 = vadd.f32 0.0, %v860
  %862 = vmatprep.mubr.bf16.mxu0 %v404
  %863 = vmatmul.mubr.bf16.gmra.mrb[0].mxu0 %v403
  %v864 = vpop.f32.mrb[0].mxu0
  %v865 = vadd.f32 0.0, %v864
  %v866 = vpop.f32.mrb[0].mxu0
  %v867 = vadd.f32 0.0, %v866
  %v868 = vpop.f32.mrb[0].mxu0
  %v869 = vadd.f32 0.0, %v868
  %v870 = vpop.f32.mrb[0].mxu0
  %v871 = vadd.f32 0.0, %v870
  %872 = vmatprep.mubr.bf16.mxu0 %v407
  %873 = vmatmul.mubr.bf16.gmra.mrb[0].mxu0 %v406
  %v874 = vpop.f32.mrb[0].mxu0
  %v875 = vadd.f32 0.0, %v874
  %v876 = vpop.f32.mrb[0].mxu0
  %v877 = vadd.f32 0.0, %v876
  %v878 = vpop.f32.mrb[0].mxu0
  %v879 = vadd.f32 0.0, %v878
  %v880 = vpop.f32.mrb[0].mxu0
  %v881 = vadd.f32 0.0, %v880
  %882 = vmatprep.mubr.bf16.mxu0 %v410
  %883 = vmatmul.mubr.bf16.gmra.mrb[0].mxu0 %v409
  %v884 = vpop.f32.mrb[0].mxu0
  %v885 = vadd.f32 0.0, %v884
  %v886 = vpop.f32.mrb[0].mxu0
  %v887 = vadd.f32 0.0, %v886
  %v888 = vpop.f32.mrb[0].mxu0
  %v889 = vadd.f32 0.0, %v888
  %v890 = vpop.f32.mrb[0].mxu0
  %v891 = vadd.f32 0.0, %v890
  %892 = vdwg.mxu0
  %893 = vmatprep.subr.bf16.mxu0 %v637
  %894 = vmatpush1.bf16.msra.mxu0 %v636
  %895 = vmatprep.subr.bf16.mxu0 %v639
  %896 = vmatpush1.bf16.msra.mxu0 %v638
  %897 = vmatprep.subr.bf16.mxu0 %v641
  %898 = vmatpush1.bf16.msra.mxu0 %v640
  %899 = vmatprep.subr.bf16.mxu0 %v643
  %900 = vmatpush1.bf16.msra.mxu0 %v642
  %901 = vmatprep.subr.bf16.mxu0 %v645
  %902 = vmatpush1.bf16.msra.mxu0 %v644
  %903 = vmatprep.subr.bf16.mxu0 %v647
  %904 = vmatpush1.bf16.msra.mxu0 %v646
  %905 = vmatprep.subr.bf16.mxu0 %v649
  %906 = vmatpush1.bf16.msra.mxu0 %v648
  %907 = vmatprep.subr.bf16.mxu0 %v651
  %908 = vmatpush1.bf16.msra.mxu0 %v650
  %909 = vmatprep.subr.bf16.mxu0 0
  %910 = vmatpush1.bf16.msra.mxu0 0
  %911 = vmatprep.subr.bf16.mxu0 0
  %912 = vmatpush1.bf16.msra.mxu0 0
  %913 = vmatprep.subr.bf16.mxu0 0
  %914 = vmatpush1.bf16.msra.mxu0 0
  %915 = vmatprep.subr.bf16.mxu0 0
  %916 = vmatpush1.bf16.msra.mxu0 0
  %917 = vmatprep.subr.bf16.mxu0 0
  %918 = vmatpush1.bf16.msra.mxu0 0
  %919 = vmatprep.subr.bf16.mxu0 0
  %920 = vmatpush1.bf16.msra.mxu0 0
  %921 = vmatprep.subr.bf16.mxu0 0
  %922 = vmatpush1.bf16.msra.mxu0 0
  %923 = vmatprep.subr.bf16.mxu0 0
  %924 = vmatpush1.bf16.msra.mxu0 0
  %925 = vmatprep.mubr.bf16.mxu0 0
  %926 = vmatmul.mubr.bf16.gmra.mrb[0].mxu0 %v366
  %v927 = vpop.f32.mrb[0].mxu0
  %v928 = vadd.f32 %v735, %v927
  %v929 = vpop.f32.mrb[0].mxu0
  %v930 = vadd.f32 %v737, %v929
  %v931 = vpop.f32.mrb[0].mxu0
  %v932 = vadd.f32 %v739, %v931
  %v933 = vpop.f32.mrb[0].mxu0
  %v934 = vadd.f32 %v741, %v933
  %935 = vmatprep.mubr.bf16.mxu0 0
  %936 = vmatmul.mubr.bf16.gmra.mrb[0].mxu0 %v369
  %v937 = vpop.f32.mrb[0].mxu0
  %v938 = vadd.f32 %v745, %v937
  %v939 = vpop.f32.mrb[0].mxu0
  %v940 = vadd.f32 %v747, %v939
  %v941 = vpop.f32.mrb[0].mxu0
  %v942 = vadd.f32 %v749, %v941
  %v943 = vpop.f32.mrb[0].mxu0
  %v944 = vadd.f32 %v751, %v943
  %945 = vmatprep.mubr.bf16.mxu0 0
  %946 = vmatmul.mubr.bf16.gmra.mrb[0].mxu0 %v372
  %v947 = vpop.f32.mrb[0].mxu0
  %v948 = vadd.f32 %v755, %v947
  %v949 = vpop.f32.mrb[0].mxu0
  %v950 = vadd.f32 %v757, %v949
  %v951 = vpop.f32.mrb[0].mxu0
  %v952 = vadd.f32 %v759, %v951
  %v953 = vpop.f32.mrb[0].mxu0
  %v954 = vadd.f32 %v761, %v953
  %955 = vmatprep.mubr.bf16.mxu0 0
  %956 = vmatmul.mubr.bf16.gmra.mrb[0].mxu0 %v375
  %v957 = vpop.f32.mrb[0].mxu0
  %v958 = vadd.f32 %v765, %v957
  %v959 = vpop.f32.mrb[0].mxu0
  %v960 = vadd.f32 %v767, %v959
  %v961 = vpop.f32.mrb[0].mxu0
  %v962 = vadd.f32 %v769, %v961
  %v963 = vpop.f32.mrb[0].mxu0
  %v964 = vadd.f32 %v771, %v963
  %965 = vmatprep.mubr.bf16.mxu0 0
  %966 = vmatmul.mubr.bf16.gmra.mrb[0].mxu0 %v378
  %v967 = vpop.f32.mrb[0].mxu0
  %v968 = vadd.f32 %v775, %v967
  %v969 = vpop.f32.mrb[0].mxu0
  %v970 = vadd.f32 %v777, %v969
  %v971 = vpop.f32.mrb[0].mxu0
  %v972 = vadd.f32 %v779, %v971
  %v973 = vpop.f32.mrb[0].mxu0
  %v974 = vadd.f32 %v781, %v973
  %975 = vmatprep.mubr.bf16.mxu0 0
  %976 = vmatmul.mubr.bf16.gmra.mrb[0].mxu0 %v381
  %v977 = vpop.f32.mrb[0].mxu0
  %v978 = vadd.f32 %v785, %v977
  %v979 = vpop.f32.mrb[0].mxu0
  %v980 = vadd.f32 %v787, %v979
  %v981 = vpop.f32.mrb[0].mxu0
  %v982 = vadd.f32 %v789, %v981
  %v983 = vpop.f32.mrb[0].mxu0
  %v984 = vadd.f32 %v791, %v983
  %985 = vmatprep.mubr.bf16.mxu0 0
  %986 = vmatmul.mubr.bf16.gmra.mrb[0].mxu0 %v384
  %v987 = vpop.f32.mrb[0].mxu0
  %v988 = vadd.f32 %v795, %v987
  %v989 = vpop.f32.mrb[0].mxu0
  %v990 = vadd.f32 %v797, %v989
  %v991 = vpop.f32.mrb[0].mxu0
  %v992 = vadd.f32 %v799, %v991
  %v993 = vpop.f32.mrb[0].mxu0
  %v994 = vadd.f32 %v801, %v993
  %995 = vmatprep.mubr.bf16.mxu0 0
  %996 = vmatmul.mubr.bf16.gmra.mrb[0].mxu0 %v387
  %v997 = vpop.f32.mrb[0].mxu0
  %v998 = vadd.f32 %v805, %v997
  %v999 = vpop.f32.mrb[0].mxu0
  %v1000 = vadd.f32 %v807, %v999
  %v1001 = vpop.f32.mrb[0].mxu0
  %v1002 = vadd.f32 %v809, %v1001
  %v1003 = vpop.f32.mrb[0].mxu0
  %v1004 = vadd.f32 %v811, %v1003
  %1005 = vmatprep.mubr.bf16.mxu0 0
  %1006 = vmatmul.mubr.bf16.gmra.mrb[0].mxu0 %v390
  %v1007 = vpop.f32.mrb[0].mxu0
  %v1008 = vadd.f32 %v815, %v1007
  %v1009 = vpop.f32.mrb[0].mxu0
  %v1010 = vadd.f32 %v817, %v1009
  %v1011 = vpop.f32.mrb[0].mxu0
  %v1012 = vadd.f32 %v819, %v1011
  %v1013 = vpop.f32.mrb[0].mxu0
  %v1014 = vadd.f32 %v821, %v1013
  %1015 = vmatprep.mubr.bf16.mxu0 0
  %1016 = vmatmul.mubr.bf16.gmra.mrb[0].mxu0 %v393
  %v1017 = vpop.f32.mrb[0].mxu0
  %v1018 = vadd.f32 %v825, %v1017
  %v1019 = vpop.f32.mrb[0].mxu0
  %v1020 = vadd.f32 %v827, %v1019
  %v1021 = vpop.f32.mrb[0].mxu0
  %v1022 = vadd.f32 %v829, %v1021
  %v1023 = vpop.f32.mrb[0].mxu0
  %v1024 = vadd.f32 %v831, %v1023
  %1025 = vmatprep.mubr.bf16.mxu0 0
  %1026 = vmatmul.mubr.bf16.gmra.mrb[0].mxu0 %v396
  %v1027 = vpop.f32.mrb[0].mxu0
  %v1028 = vadd.f32 %v835, %v1027
  %v1029 = vpop.f32.mrb[0].mxu0
  %v1030 = vadd.f32 %v837, %v1029
  %v1031 = vpop.f32.mrb[0].mxu0
  %v1032 = vadd.f32 %v839, %v1031
  %v1033 = vpop.f32.mrb[0].mxu0
  %v1034 = vadd.f32 %v841, %v1033
  %1035 = vmatprep.mubr.bf16.mxu0 0
  %1036 = vmatmul.mubr.bf16.gmra.mrb[0].mxu0 %v399
  %v1037 = vpop.f32.mrb[0].mxu0
  %v1038 = vadd.f32 %v845, %v1037
  %v1039 = vpop.f32.mrb[0].mxu0
  %v1040 = vadd.f32 %v847, %v1039
  %v1041 = vpop.f32.mrb[0].mxu0
  %v1042 = vadd.f32 %v849, %v1041
  %v1043 = vpop.f32.mrb[0].mxu0
  %v1044 = vadd.f32 %v851, %v1043
  %1045 = vmatprep.mubr.bf16.mxu0 0
  %1046 = vmatmul.mubr.bf16.gmra.mrb[0].mxu0 %v402
  %v1047 = vpop.f32.mrb[0].mxu0
  %v1048 = vadd.f32 %v855, %v1047
  %v1049 = vpop.f32.mrb[0].mxu0
  %v1050 = vadd.f32 %v857, %v1049
  %v1051 = vpop.f32.mrb[0].mxu0
  %v1052 = vadd.f32 %v859, %v1051
  %v1053 = vpop.f32.mrb[0].mxu0
  %v1054 = vadd.f32 %v861, %v1053
  %1055 = vmatprep.mubr.bf16.mxu0 0
  %1056 = vmatmul.mubr.bf16.gmra.mrb[0].mxu0 %v405
  %v1057 = vpop.f32.mrb[0].mxu0
  %v1058 = vadd.f32 %v865, %v1057
  %v1059 = vpop.f32.mrb[0].mxu0
  %v1060 = vadd.f32 %v867, %v1059
  %v1061 = vpop.f32.mrb[0].mxu0
  %v1062 = vadd.f32 %v869, %v1061
  %v1063 = vpop.f32.mrb[0].mxu0
  %v1064 = vadd.f32 %v871, %v1063
  %1065 = vmatprep.mubr.bf16.mxu0 0
  %1066 = vmatmul.mubr.bf16.gmra.mrb[0].mxu0 %v408
  %v1067 = vpop.f32.mrb[0].mxu0
  %v1068 = vadd.f32 %v875, %v1067
  %v1069 = vpop.f32.mrb[0].mxu0
  %v1070 = vadd.f32 %v877, %v1069
  %v1071 = vpop.f32.mrb[0].mxu0
  %v1072 = vadd.f32 %v879, %v1071
  %v1073 = vpop.f32.mrb[0].mxu0
  %v1074 = vadd.f32 %v881, %v1073
  %1075 = vmatprep.mubr.bf16.mxu0 0
  %1076 = vmatmul.mubr.bf16.gmra.mrb[0].mxu0 %v411
  %v1077 = vpop.f32.mrb[0].mxu0
  %v1078 = vadd.f32 %v885, %v1077
  %v1079 = vpop.f32.mrb[0].mxu0
  %v1080 = vadd.f32 %v887, %v1079
  %v1081 = vpop.f32.mrb[0].mxu0
  %v1082 = vadd.f32 %v889, %v1081
  %v1083 = vpop.f32.mrb[0].mxu0
  %v1084 = vadd.f32 %v891, %v1083
  %1085 = vdwg.mxu0
  %v1086 = vpack.c.bf16 %v932, %v928
  %v1087 = vpack.c.bf16 %v934, %v930
  %v1088 = vpack.c.bf16 %v942, %v938
  %v1089 = vpack.c.bf16 %v944, %v940
  %v1090 = vpack.c.bf16 %v952, %v948
  %v1091 = vpack.c.bf16 %v954, %v950
  %v1092 = vpack.c.bf16 %v962, %v958
  %v1093 = vpack.c.bf16 %v964, %v960
  %v1094 = vpack.c.bf16 %v972, %v968
  %v1095 = vpack.c.bf16 %v974, %v970
  %v1096 = vpack.c.bf16 %v982, %v978
  %v1097 = vpack.c.bf16 %v984, %v980
  %v1098 = vpack.c.bf16 %v992, %v988
  %v1099 = vpack.c.bf16 %v994, %v990
  %v1100 = vpack.c.bf16 %v1002, %v998
  %v1101 = vpack.c.bf16 %v1004, %v1000
  %v1102 = vpack.c.bf16 %v1012, %v1008
  %v1103 = vpack.c.bf16 %v1014, %v1010
  %v1104 = vpack.c.bf16 %v1022, %v1018
  %v1105 = vpack.c.bf16 %v1024, %v1020
  %v1106 = vpack.c.bf16 %v1032, %v1028
  %v1107 = vpack.c.bf16 %v1034, %v1030
  %v1108 = vpack.c.bf16 %v1042, %v1038
  %v1109 = vpack.c.bf16 %v1044, %v1040
  %v1110 = vpack.c.bf16 %v1052, %v1048
  %v1111 = vpack.c.bf16 %v1054, %v1050
  %v1112 = vpack.c.bf16 %v1062, %v1058
  %v1113 = vpack.c.bf16 %v1064, %v1060
  %v1114 = vpack.c.bf16 %v1072, %v1068
  %v1115 = vpack.c.bf16 %v1074, %v1070
  %v1116 = vpack.c.bf16 %v1082, %v1078
  %v1117 = vpack.c.bf16 %v1084, %v1080
  %v1118 = vld [vmem:[%s4] sm:$0x3]
  %v1120 = vlaneseq
  %v1121 = vshrl.u32 %v1120, 7
  %v1122 = vsub.s32 0, %v1121
  %v1123 = vrot.slane %v1118, %v1122
  %v1124 = vlaneseq
  %v1125 = vshrl.u32 %v1124, 7
  %v1126 = vsub.s32 1, %v1125
  %v1127 = vrot.slane %v1118, %v1126
  %v1162 = vunpack.c.l.b16 %v60
  %v1163 = vunpack.c.h.b16 %v60
  %v1164 = vunpack.c.l.b16 %v61
  %v1165 = vunpack.c.h.b16 %v61
  %v1166 = vunpack.c.l.b16 %v62
  %v1167 = vunpack.c.h.b16 %v62
  %v1168 = vunpack.c.l.b16 %v63
  %v1169 = vunpack.c.h.b16 %v63
  %v1170 = vunpack.c.l.b16 %v64
  %v1171 = vunpack.c.h.b16 %v64
  %v1172 = vunpack.c.l.b16 %v65
  %v1173 = vunpack.c.h.b16 %v65
  %v1174 = vunpack.c.l.b16 %v66
  %v1175 = vunpack.c.h.b16 %v66
  %v1176 = vunpack.c.l.b16 %v67
  %v1177 = vunpack.c.h.b16 %v67
  %v1178 = vunpack.c.l.b16 %v68
  %v1179 = vunpack.c.h.b16 %v68
  %v1180 = vunpack.c.l.b16 %v69
  %v1181 = vunpack.c.h.b16 %v69
  %v1182 = vunpack.c.l.b16 %v70
  %v1183 = vunpack.c.h.b16 %v70
  %v1184 = vunpack.c.l.b16 %v71
  %v1185 = vunpack.c.h.b16 %v71
  %v1186 = vunpack.c.l.b16 %v72
  %v1187 = vunpack.c.h.b16 %v72
  %v1188 = vunpack.c.l.b16 %v73
  %v1189 = vunpack.c.h.b16 %v73
  %v1190 = vunpack.c.l.b16 %v74
  %v1191 = vunpack.c.h.b16 %v74
  %v1192 = vunpack.c.l.b16 %v75
  %v1193 = vunpack.c.h.b16 %v75
  %v1194 = vunpack.c.l.b16 %v76
  %v1195 = vunpack.c.h.b16 %v76
  %v1196 = vunpack.c.l.b16 %v77
  %v1197 = vunpack.c.h.b16 %v77
  %v1198 = vunpack.c.l.b16 %v78
  %v1199 = vunpack.c.h.b16 %v78
  %v1200 = vunpack.c.l.b16 %v79
  %v1201 = vunpack.c.h.b16 %v79
  %v1202 = vunpack.c.l.b16 %v80
  %v1203 = vunpack.c.h.b16 %v80
  %v1204 = vunpack.c.l.b16 %v81
  %v1205 = vunpack.c.h.b16 %v81
  %v1206 = vunpack.c.l.b16 %v82
  %v1207 = vunpack.c.h.b16 %v82
  %v1208 = vunpack.c.l.b16 %v83
  %v1209 = vunpack.c.h.b16 %v83
  %v1210 = vunpack.c.l.b16 %v84
  %v1211 = vunpack.c.h.b16 %v84
  %v1212 = vunpack.c.l.b16 %v85
  %v1213 = vunpack.c.h.b16 %v85
  %v1214 = vunpack.c.l.b16 %v86
  %v1215 = vunpack.c.h.b16 %v86
  %v1216 = vunpack.c.l.b16 %v87
  %v1217 = vunpack.c.h.b16 %v87
  %v1218 = vunpack.c.l.b16 %v88
  %v1219 = vunpack.c.h.b16 %v88
  %v1220 = vunpack.c.l.b16 %v89
  %v1221 = vunpack.c.h.b16 %v89
  %v1222 = vunpack.c.l.b16 %v90
  %v1223 = vunpack.c.h.b16 %v90
  %v1224 = vunpack.c.l.b16 %v91
  %v1225 = vunpack.c.h.b16 %v91
  %v1226 = vpack.c.b16 %v1164, %v1162
  %v1227 = vpack.c.b16 %v1165, %v1163
  %v1228 = vpack.c.b16 %v1168, %v1166
  %v1229 = vpack.c.b16 %v1169, %v1167
  %v1230 = vpack.c.b16 %v1172, %v1170
  %v1231 = vpack.c.b16 %v1173, %v1171
  %v1232 = vpack.c.b16 %v1176, %v1174
  %v1233 = vpack.c.b16 %v1177, %v1175
  %v1234 = vpack.c.b16 %v1180, %v1178
  %v1235 = vpack.c.b16 %v1181, %v1179
  %v1236 = vpack.c.b16 %v1184, %v1182
  %v1237 = vpack.c.b16 %v1185, %v1183
  %v1238 = vpack.c.b16 %v1188, %v1186
  %v1239 = vpack.c.b16 %v1189, %v1187
  %v1240 = vpack.c.b16 %v1192, %v1190
  %v1241 = vpack.c.b16 %v1193, %v1191
  %v1242 = vpack.c.b16 %v1196, %v1194
  %v1243 = vpack.c.b16 %v1197, %v1195
  %v1244 = vpack.c.b16 %v1200, %v1198
  %v1245 = vpack.c.b16 %v1201, %v1199
  %v1246 = vpack.c.b16 %v1204, %v1202
  %v1247 = vpack.c.b16 %v1205, %v1203
  %v1248 = vpack.c.b16 %v1208, %v1206
  %v1249 = vpack.c.b16 %v1209, %v1207
  %v1250 = vpack.c.b16 %v1212, %v1210
  %v1251 = vpack.c.b16 %v1213, %v1211
  %v1252 = vpack.c.b16 %v1216, %v1214
  %v1253 = vpack.c.b16 %v1217, %v1215
  %v1254 = vpack.c.b16 %v1220, %v1218
  %v1255 = vpack.c.b16 %v1221, %v1219
  %v1256 = vpack.c.b16 %v1224, %v1222
  %v1257 = vpack.c.b16 %v1225, %v1223
  %1290 = vmatprep.subr.bf16.mxu0 %v1087
  %1291 = vmatpush1.bf16.msra.mxu0 %v1086
  %1292 = vmatprep.subr.bf16.mxu0 %v1089
  %1293 = vmatpush1.bf16.msra.mxu0 %v1088
  %1294 = vmatprep.subr.bf16.mxu0 %v1091
  %1295 = vmatpush1.bf16.msra.mxu0 %v1090
  %1296 = vmatprep.subr.bf16.mxu0 %v1093
  %1297 = vmatpush1.bf16.msra.mxu0 %v1092
  %1298 = vmatprep.subr.bf16.mxu0 %v1095
  %1299 = vmatpush1.bf16.msra.mxu0 %v1094
  %1300 = vmatprep.subr.bf16.mxu0 %v1097
  %1301 = vmatpush1.bf16.msra.mxu0 %v1096
  %1302 = vmatprep.subr.bf16.mxu0 %v1099
  %1303 = vmatpush1.bf16.msra.mxu0 %v1098
  %1304 = vmatprep.subr.bf16.mxu0 %v1101
  %1305 = vmatpush1.bf16.msra.mxu0 %v1100
  %1306 = vmatprep.subr.bf16.mxu0 %v1103
  %1307 = vmatpush1.bf16.msra.mxu0 %v1102
  %1308 = vmatprep.subr.bf16.mxu0 %v1105
  %1309 = vmatpush1.bf16.msra.mxu0 %v1104
  %1310 = vmatprep.subr.bf16.mxu0 %v1107
  %1311 = vmatpush1.bf16.msra.mxu0 %v1106
  %1312 = vmatprep.subr.bf16.mxu0 %v1109
  %1313 = vmatpush1.bf16.msra.mxu0 %v1108
  %1314 = vmatprep.subr.bf16.mxu0 %v1111
  %1315 = vmatpush1.bf16.msra.mxu0 %v1110
  %1316 = vmatprep.subr.bf16.mxu0 %v1113
  %1317 = vmatpush1.bf16.msra.mxu0 %v1112
  %1318 = vmatprep.subr.bf16.mxu0 %v1115
  %1319 = vmatpush1.bf16.msra.mxu0 %v1114
  %1320 = vmatprep.subr.bf16.mxu0 %v1117
  %1321 = vmatpush1.bf16.msra.mxu0 %v1116
  %1322 = vmatprep.mubr.bf16.mxu0 %v1227
  %1323 = vmatmul.mubr.bf16.gmra.mrb[0].mxu0 %v1226
  %v1324 = vpop.f32.mrb[0].mxu0
  %v1325 = vadd.f32 %v1123, %v1324
  %v1326 = vpop.f32.mrb[0].mxu0
  %v1327 = vadd.f32 %v1127, %v1326
  %v1328 = vpop.f32.mrb[0].mxu0
  %v1329 = vadd.f32 %v1123, %v1328
  %v1330 = vpop.f32.mrb[0].mxu0
  %v1331 = vadd.f32 %v1127, %v1330
  %1332 = vmatprep.mubr.bf16.mxu0 %v1229
  %1333 = vmatmul.mubr.bf16.gmra.mrb[0].mxu0 %v1228
  %v1334 = vpop.f32.mrb[0].mxu0
  %v1335 = vadd.f32 %v1123, %v1334
  %v1336 = vpop.f32.mrb[0].mxu0
  %v1337 = vadd.f32 %v1127, %v1336
  %v1338 = vpop.f32.mrb[0].mxu0
  %v1339 = vadd.f32 %v1123, %v1338
  %v1340 = vpop.f32.mrb[0].mxu0
  %v1341 = vadd.f32 %v1127, %v1340
  %1342 = vmatprep.mubr.bf16.mxu0 %v1231
  %1343 = vmatmul.mubr.bf16.gmra.mrb[0].mxu0 %v1230
  %v1344 = vpop.f32.mrb[0].mxu0
  %v1345 = vadd.f32 %v1123, %v1344
  %v1346 = vpop.f32.mrb[0].mxu0
  %v1347 = vadd.f32 %v1127, %v1346
  %v1348 = vpop.f32.mrb[0].mxu0
  %v1349 = vadd.f32 %v1123, %v1348
  %v1350 = vpop.f32.mrb[0].mxu0
  %v1351 = vadd.f32 %v1127, %v1350
  %1352 = vmatprep.mubr.bf16.mxu0 %v1233
  %1353 = vmatmul.mubr.bf16.gmra.mrb[0].mxu0 %v1232
  %v1354 = vpop.f32.mrb[0].mxu0
  %v1355 = vadd.f32 %v1123, %v1354
  %v1356 = vpop.f32.mrb[0].mxu0
  %v1357 = vadd.f32 %v1127, %v1356
  %v1358 = vpop.f32.mrb[0].mxu0
  %v1359 = vadd.f32 %v1123, %v1358
  %v1360 = vpop.f32.mrb[0].mxu0
  %v1361 = vadd.f32 %v1127, %v1360
  %1362 = vmatprep.mubr.bf16.mxu0 %v1235
  %1363 = vmatmul.mubr.bf16.gmra.mrb[0].mxu0 %v1234
  %v1364 = vpop.f32.mrb[0].mxu0
  %v1365 = vadd.f32 %v1123, %v1364
  %v1366 = vpop.f32.mrb[0].mxu0
  %v1367 = vadd.f32 %v1127, %v1366
  %v1368 = vpop.f32.mrb[0].mxu0
  %v1369 = vadd.f32 %v1123, %v1368
  %v1370 = vpop.f32.mrb[0].mxu0
  %v1371 = vadd.f32 %v1127, %v1370
  %1372 = vmatprep.mubr.bf16.mxu0 %v1237
  %1373 = vmatmul.mubr.bf16.gmra.mrb[0].mxu0 %v1236
  %v1374 = vpop.f32.mrb[0].mxu0
  %v1375 = vadd.f32 %v1123, %v1374
  %v1376 = vpop.f32.mrb[0].mxu0
  %v1377 = vadd.f32 %v1127, %v1376
  %v1378 = vpop.f32.mrb[0].mxu0
  %v1379 = vadd.f32 %v1123, %v1378
  %v1380 = vpop.f32.mrb[0].mxu0
  %v1381 = vadd.f32 %v1127, %v1380
  %1382 = vmatprep.mubr.bf16.mxu0 %v1239
  %1383 = vmatmul.mubr.bf16.gmra.mrb[0].mxu0 %v1238
  %v1384 = vpop.f32.mrb[0].mxu0
  %v1385 = vadd.f32 %v1123, %v1384
  %v1386 = vpop.f32.mrb[0].mxu0
  %v1387 = vadd.f32 %v1127, %v1386
  %v1388 = vpop.f32.mrb[0].mxu0
  %v1389 = vadd.f32 %v1123, %v1388
  %v1390 = vpop.f32.mrb[0].mxu0
  %v1391 = vadd.f32 %v1127, %v1390
  %1392 = vmatprep.mubr.bf16.mxu0 %v1241
  %1393 = vmatmul.mubr.bf16.gmra.mrb[0].mxu0 %v1240
  %v1394 = vpop.f32.mrb[0].mxu0
  %v1395 = vadd.f32 %v1123, %v1394
  %v1396 = vpop.f32.mrb[0].mxu0
  %v1397 = vadd.f32 %v1127, %v1396
  %v1398 = vpop.f32.mrb[0].mxu0
  %v1399 = vadd.f32 %v1123, %v1398
  %v1400 = vpop.f32.mrb[0].mxu0
  %v1401 = vadd.f32 %v1127, %v1400
  %1402 = vmatprep.mubr.bf16.mxu0 %v1243
  %1403 = vmatmul.mubr.bf16.gmra.mrb[0].mxu0 %v1242
  %v1404 = vpop.f32.mrb[0].mxu0
  %v1405 = vadd.f32 %v1123, %v1404
  %v1406 = vpop.f32.mrb[0].mxu0
  %v1407 = vadd.f32 %v1127, %v1406
  %v1408 = vpop.f32.mrb[0].mxu0
  %v1409 = vadd.f32 %v1123, %v1408
  %v1410 = vpop.f32.mrb[0].mxu0
  %v1411 = vadd.f32 %v1127, %v1410
  %1412 = vmatprep.mubr.bf16.mxu0 %v1245
  %1413 = vmatmul.mubr.bf16.gmra.mrb[0].mxu0 %v1244
  %v1414 = vpop.f32.mrb[0].mxu0
  %v1415 = vadd.f32 %v1123, %v1414
  %v1416 = vpop.f32.mrb[0].mxu0
  %v1417 = vadd.f32 %v1127, %v1416
  %v1418 = vpop.f32.mrb[0].mxu0
  %v1419 = vadd.f32 %v1123, %v1418
  %v1420 = vpop.f32.mrb[0].mxu0
  %v1421 = vadd.f32 %v1127, %v1420
  %1422 = vmatprep.mubr.bf16.mxu0 %v1247
  %1423 = vmatmul.mubr.bf16.gmra.mrb[0].mxu0 %v1246
  %v1424 = vpop.f32.mrb[0].mxu0
  %v1425 = vadd.f32 %v1123, %v1424
  %v1426 = vpop.f32.mrb[0].mxu0
  %v1427 = vadd.f32 %v1127, %v1426
  %v1428 = vpop.f32.mrb[0].mxu0
  %v1429 = vadd.f32 %v1123, %v1428
  %v1430 = vpop.f32.mrb[0].mxu0
  %v1431 = vadd.f32 %v1127, %v1430
  %1432 = vmatprep.mubr.bf16.mxu0 %v1249
  %1433 = vmatmul.mubr.bf16.gmra.mrb[0].mxu0 %v1248
  %v1434 = vpop.f32.mrb[0].mxu0
  %v1435 = vadd.f32 %v1123, %v1434
  %v1436 = vpop.f32.mrb[0].mxu0
  %v1437 = vadd.f32 %v1127, %v1436
  %v1438 = vpop.f32.mrb[0].mxu0
  %v1439 = vadd.f32 %v1123, %v1438
  %v1440 = vpop.f32.mrb[0].mxu0
  %v1441 = vadd.f32 %v1127, %v1440
  %1442 = vmatprep.mubr.bf16.mxu0 %v1251
  %1443 = vmatmul.mubr.bf16.gmra.mrb[0].mxu0 %v1250
  %v1444 = vpop.f32.mrb[0].mxu0
  %v1445 = vadd.f32 %v1123, %v1444
  %v1446 = vpop.f32.mrb[0].mxu0
  %v1447 = vadd.f32 %v1127, %v1446
  %v1448 = vpop.f32.mrb[0].mxu0
  %v1449 = vadd.f32 %v1123, %v1448
  %v1450 = vpop.f32.mrb[0].mxu0
  %v1451 = vadd.f32 %v1127, %v1450
  %1452 = vmatprep.mubr.bf16.mxu0 %v1253
  %1453 = vmatmul.mubr.bf16.gmra.mrb[0].mxu0 %v1252
  %v1454 = vpop.f32.mrb[0].mxu0
  %v1455 = vadd.f32 %v1123, %v1454
  %v1456 = vpop.f32.mrb[0].mxu0
  %v1457 = vadd.f32 %v1127, %v1456
  %v1458 = vpop.f32.mrb[0].mxu0
  %v1459 = vadd.f32 %v1123, %v1458
  %v1460 = vpop.f32.mrb[0].mxu0
  %v1461 = vadd.f32 %v1127, %v1460
  %1462 = vmatprep.mubr.bf16.mxu0 %v1255
  %1463 = vmatmul.mubr.bf16.gmra.mrb[0].mxu0 %v1254
  %v1464 = vpop.f32.mrb[0].mxu0
  %v1465 = vadd.f32 %v1123, %v1464
  %v1466 = vpop.f32.mrb[0].mxu0
  %v1467 = vadd.f32 %v1127, %v1466
  %v1468 = vpop.f32.mrb[0].mxu0
  %v1469 = vadd.f32 %v1123, %v1468
  %v1470 = vpop.f32.mrb[0].mxu0
  %v1471 = vadd.f32 %v1127, %v1470
  %1472 = vmatprep.mubr.bf16.mxu0 %v1257
  %1473 = vmatmul.mubr.bf16.gmra.mrb[0].mxu0 %v1256
  %v1474 = vpop.f32.mrb[0].mxu0
  %v1475 = vadd.f32 %v1123, %v1474
  %v1476 = vpop.f32.mrb[0].mxu0
  %v1477 = vadd.f32 %v1127, %v1476
  %v1478 = vpop.f32.mrb[0].mxu0
  %v1479 = vadd.f32 %v1123, %v1478
  %v1480 = vpop.f32.mrb[0].mxu0
  %v1481 = vadd.f32 %v1127, %v1480
  %1482 = vdwg.mxu0
  %v1483 = vmax.f32 %v1325, 0.0
  %v1484 = vmax.f32 %v1327, 0.0
  %v1485 = vmax.f32 %v1329, 0.0
  %v1486 = vmax.f32 %v1331, 0.0
  %v1487 = vmax.f32 %v1335, 0.0
  %v1488 = vmax.f32 %v1337, 0.0
  %v1489 = vmax.f32 %v1339, 0.0
  %v1490 = vmax.f32 %v1341, 0.0
  %v1491 = vmax.f32 %v1345, 0.0
  %v1492 = vmax.f32 %v1347, 0.0
  %v1493 = vmax.f32 %v1349, 0.0
  %v1494 = vmax.f32 %v1351, 0.0
  %v1495 = vmax.f32 %v1355, 0.0
  %v1496 = vmax.f32 %v1357, 0.0
  %v1497 = vmax.f32 %v1359, 0.0
  %v1498 = vmax.f32 %v1361, 0.0
  %v1499 = vmax.f32 %v1365, 0.0
  %v1500 = vmax.f32 %v1367, 0.0
  %v1501 = vmax.f32 %v1369, 0.0
  %v1502 = vmax.f32 %v1371, 0.0
  %v1503 = vmax.f32 %v1375, 0.0
  %v1504 = vmax.f32 %v1377, 0.0
  %v1505 = vmax.f32 %v1379, 0.0
  %v1506 = vmax.f32 %v1381, 0.0
  %v1507 = vmax.f32 %v1385, 0.0
  %v1508 = vmax.f32 %v1387, 0.0
  %v1509 = vmax.f32 %v1389, 0.0
  %v1510 = vmax.f32 %v1391, 0.0
  %v1511 = vmax.f32 %v1395, 0.0
  %v1512 = vmax.f32 %v1397, 0.0
  %v1513 = vmax.f32 %v1399, 0.0
  %v1514 = vmax.f32 %v1401, 0.0
  %v1515 = vmax.f32 %v1405, 0.0
  %v1516 = vmax.f32 %v1407, 0.0
  %v1517 = vmax.f32 %v1409, 0.0
  %v1518 = vmax.f32 %v1411, 0.0
  %v1519 = vmax.f32 %v1415, 0.0
  %v1520 = vmax.f32 %v1417, 0.0
  %v1521 = vmax.f32 %v1419, 0.0
  %v1522 = vmax.f32 %v1421, 0.0
  %v1523 = vmax.f32 %v1425, 0.0
  %v1524 = vmax.f32 %v1427, 0.0
  %v1525 = vmax.f32 %v1429, 0.0
  %v1526 = vmax.f32 %v1431, 0.0
  %v1527 = vmax.f32 %v1435, 0.0
  %v1528 = vmax.f32 %v1437, 0.0
  %v1529 = vmax.f32 %v1439, 0.0
  %v1530 = vmax.f32 %v1441, 0.0
  %v1531 = vmax.f32 %v1445, 0.0
  %v1532 = vmax.f32 %v1447, 0.0
  %v1533 = vmax.f32 %v1449, 0.0
  %v1534 = vmax.f32 %v1451, 0.0
  %v1535 = vmax.f32 %v1455, 0.0
  %v1536 = vmax.f32 %v1457, 0.0
  %v1537 = vmax.f32 %v1459, 0.0
  %v1538 = vmax.f32 %v1461, 0.0
  %v1539 = vmax.f32 %v1465, 0.0
  %v1540 = vmax.f32 %v1467, 0.0
  %v1541 = vmax.f32 %v1469, 0.0
  %v1542 = vmax.f32 %v1471, 0.0
  %v1543 = vmax.f32 %v1475, 0.0
  %v1544 = vmax.f32 %v1477, 0.0
  %v1545 = vmax.f32 %v1479, 0.0
  %v1546 = vmax.f32 %v1481, 0.0
  %v1547 = vld [vmem:[%s5] sm:$0x3]
  %v1549 = vlaneseq
  %v1550 = vshrl.u32 %v1549, 7
  %v1551 = vsub.s32 0, %v1550
  %v1552 = vrot.slane %v1547, %v1551
  %v1553 = vlaneseq
  %v1554 = vshrl.u32 %v1553, 7
  %v1555 = vsub.s32 1, %v1554
  %v1556 = vrot.slane %v1547, %v1555
  %v1559 = vadd.f32 %v1483, %v1552
  %v1560 = vadd.f32 %v1484, %v1556
  %v1561 = vadd.f32 %v1485, %v1552
  %v1562 = vadd.f32 %v1486, %v1556
  %v1563 = vadd.f32 %v1487, %v1552
  %v1564 = vadd.f32 %v1488, %v1556
  %v1565 = vadd.f32 %v1489, %v1552
  %v1566 = vadd.f32 %v1490, %v1556
  %v1567 = vadd.f32 %v1491, %v1552
  %v1568 = vadd.f32 %v1492, %v1556
  %v1569 = vadd.f32 %v1493, %v1552
  %v1570 = vadd.f32 %v1494, %v1556
  %v1571 = vadd.f32 %v1495, %v1552
  %v1572 = vadd.f32 %v1496, %v1556
  %v1573 = vadd.f32 %v1497, %v1552
  %v1574 = vadd.f32 %v1498, %v1556
  %v1575 = vadd.f32 %v1499, %v1552
  %v1576 = vadd.f32 %v1500, %v1556
  %v1577 = vadd.f32 %v1501, %v1552
  %v1578 = vadd.f32 %v1502, %v1556
  %v1579 = vadd.f32 %v1503, %v1552
  %v1580 = vadd.f32 %v1504, %v1556
  %v1581 = vadd.f32 %v1505, %v1552
  %v1582 = vadd.f32 %v1506, %v1556
  %v1583 = vadd.f32 %v1507, %v1552
  %v1584 = vadd.f32 %v1508, %v1556
  %v1585 = vadd.f32 %v1509, %v1552
  %v1586 = vadd.f32 %v1510, %v1556
  %v1587 = vadd.f32 %v1511, %v1552
  %v1588 = vadd.f32 %v1512, %v1556
  %v1589 = vadd.f32 %v1513, %v1552
  %v1590 = vadd.f32 %v1514, %v1556
  %v1591 = vadd.f32 %v1515, %v1552
  %v1592 = vadd.f32 %v1516, %v1556
  %v1593 = vadd.f32 %v1517, %v1552
  %v1594 = vadd.f32 %v1518, %v1556
  %v1595 = vadd.f32 %v1519, %v1552
  %v1596 = vadd.f32 %v1520, %v1556
  %v1597 = vadd.f32 %v1521, %v1552
  %v1598 = vadd.f32 %v1522, %v1556
  %v1599 = vadd.f32 %v1523, %v1552
  %v1600 = vadd.f32 %v1524, %v1556
  %v1601 = vadd.f32 %v1525, %v1552
  %v1602 = vadd.f32 %v1526, %v1556
  %v1603 = vadd.f32 %v1527, %v1552
  %v1604 = vadd.f32 %v1528, %v1556
  %v1605 = vadd.f32 %v1529, %v1552
  %v1606 = vadd.f32 %v1530, %v1556
  %v1607 = vadd.f32 %v1531, %v1552
  %v1608 = vadd.f32 %v1532, %v1556
  %v1609 = vadd.f32 %v1533, %v1552
  %v1610 = vadd.f32 %v1534, %v1556
  %v1611 = vadd.f32 %v1535, %v1552
  %v1612 = vadd.f32 %v1536, %v1556
  %v1613 = vadd.f32 %v1537, %v1552
  %v1614 = vadd.f32 %v1538, %v1556
  %v1615 = vadd.f32 %v1539, %v1552
  %v1616 = vadd.f32 %v1540, %v1556
  %v1617 = vadd.f32 %v1541, %v1552
  %v1618 = vadd.f32 %v1542, %v1556
  %v1619 = vadd.f32 %v1543, %v1552
  %v1620 = vadd.f32 %v1544, %v1556
  %v1621 = vadd.f32 %v1545, %v1552
  %v1622 = vadd.f32 %v1546, %v1556
  %v1623 = vpack.c.bf16 %v1561, %v1559
  %v1624 = vpack.c.bf16 %v1562, %v1560
  %v1625 = vpack.c.bf16 %v1565, %v1563
  %v1626 = vpack.c.bf16 %v1566, %v1564
  %v1627 = vpack.c.bf16 %v1569, %v1567
  %v1628 = vpack.c.bf16 %v1570, %v1568
  %v1629 = vpack.c.bf16 %v1573, %v1571
  %v1630 = vpack.c.bf16 %v1574, %v1572
  %v1631 = vpack.c.bf16 %v1577, %v1575
  %v1632 = vpack.c.bf16 %v1578, %v1576
  %v1633 = vpack.c.bf16 %v1581, %v1579
  %v1634 = vpack.c.bf16 %v1582, %v1580
  %v1635 = vpack.c.bf16 %v1585, %v1583
  %v1636 = vpack.c.bf16 %v1586, %v1584
  %v1637 = vpack.c.bf16 %v1589, %v1587
  %v1638 = vpack.c.bf16 %v1590, %v1588
  %v1639 = vpack.c.bf16 %v1593, %v1591
  %v1640 = vpack.c.bf16 %v1594, %v1592
  %v1641 = vpack.c.bf16 %v1597, %v1595
  %v1642 = vpack.c.bf16 %v1598, %v1596
  %v1643 = vpack.c.bf16 %v1601, %v1599
  %v1644 = vpack.c.bf16 %v1602, %v1600
  %v1645 = vpack.c.bf16 %v1605, %v1603
  %v1646 = vpack.c.bf16 %v1606, %v1604
  %v1647 = vpack.c.bf16 %v1609, %v1607
  %v1648 = vpack.c.bf16 %v1610, %v1608
  %v1649 = vpack.c.bf16 %v1613, %v1611
  %v1650 = vpack.c.bf16 %v1614, %v1612
  %v1651 = vpack.c.bf16 %v1617, %v1615
  %v1652 = vpack.c.bf16 %v1618, %v1616
  %v1653 = vpack.c.bf16 %v1621, %v1619
  %v1654 = vpack.c.bf16 %v1622, %v1620
  %v1655 = vld [vmem:[%s6] sm:$0xf]
  %v1656 = vld [vmem:[%s6 + $0x4] sm:$0xf]
  %v1657 = vld [vmem:[%s6 + $0x8] sm:$0xf]
  %v1658 = vld [vmem:[%s6 + $0xc] sm:$0xf]
  %v1659 = vld [vmem:[%s6 + $0x10] sm:$0xf]
  %v1660 = vld [vmem:[%s6 + $0x14] sm:$0xf]
  %v1661 = vld [vmem:[%s6 + $0x18] sm:$0xf]
  %v1662 = vld [vmem:[%s6 + $0x1c] sm:$0xf]
  %v1663 = vld [vmem:[%s6 + $0x20] sm:$0xf]
  %v1664 = vld [vmem:[%s6 + $0x24] sm:$0xf]
  %v1665 = vld [vmem:[%s6 + $0x28] sm:$0xf]
  %v1666 = vld [vmem:[%s6 + $0x2c] sm:$0xf]
  %v1667 = vld [vmem:[%s6 + $0x30] sm:$0xf]
  %v1668 = vld [vmem:[%s6 + $0x34] sm:$0xf]
  %v1669 = vld [vmem:[%s6 + $0x38] sm:$0xf]
  %v1670 = vld [vmem:[%s6 + $0x3c] sm:$0xf]
  %v1671 = vld [vmem:[%s6 + $0x40] sm:$0xf]
  %v1672 = vld [vmem:[%s6 + $0x44] sm:$0xf]
  %v1673 = vld [vmem:[%s6 + $0x48] sm:$0xf]
  %v1674 = vld [vmem:[%s6 + $0x4c] sm:$0xf]
  %v1675 = vld [vmem:[%s6 + $0x50] sm:$0xf]
  %v1676 = vld [vmem:[%s6 + $0x54] sm:$0xf]
  %v1677 = vld [vmem:[%s6 + $0x58] sm:$0xf]
  %v1678 = vld [vmem:[%s6 + $0x5c] sm:$0xf]
  %v1679 = vld [vmem:[%s6 + $0x60] sm:$0xf]
  %v1680 = vld [vmem:[%s6 + $0x64] sm:$0xf]
  %v1681 = vld [vmem:[%s6 + $0x68] sm:$0xf]
  %v1682 = vld [vmem:[%s6 + $0x6c] sm:$0xf]
  %v1683 = vld [vmem:[%s6 + $0x70] sm:$0xf]
  %v1684 = vld [vmem:[%s6 + $0x74] sm:$0xf]
  %v1685 = vld [vmem:[%s6 + $0x78] sm:$0xf]
  %v1686 = vld [vmem:[%s6 + $0x7c] sm:$0xf]
  %v1719 = vunpack.c.l.b16 %v1655
  %v1720 = vunpack.c.l.b16 %v1656
  %v1721 = vunpack.c.l.b16 %v1657
  %v1722 = vunpack.c.l.b16 %v1658
  %v1723 = vunpack.c.l.b16 %v1659
  %v1724 = vunpack.c.l.b16 %v1660
  %v1725 = vunpack.c.l.b16 %v1661
  %v1726 = vunpack.c.l.b16 %v1662
  %v1727 = vunpack.c.l.b16 %v1663
  %v1728 = vunpack.c.l.b16 %v1664
  %v1729 = vunpack.c.l.b16 %v1665
  %v1730 = vunpack.c.l.b16 %v1666
  %v1731 = vunpack.c.l.b16 %v1667
  %v1732 = vunpack.c.l.b16 %v1668
  %v1733 = vunpack.c.l.b16 %v1669
  %v1734 = vunpack.c.l.b16 %v1670
  %v1735 = vunpack.c.l.b16 %v1671
  %v1736 = vunpack.c.l.b16 %v1672
  %v1737 = vunpack.c.l.b16 %v1673
  %v1738 = vunpack.c.l.b16 %v1674
  %v1739 = vunpack.c.l.b16 %v1675
  %v1740 = vunpack.c.l.b16 %v1676
  %v1741 = vunpack.c.l.b16 %v1677
  %v1742 = vunpack.c.l.b16 %v1678
  %v1743 = vunpack.c.l.b16 %v1679
  %v1744 = vunpack.c.l.b16 %v1680
  %v1745 = vunpack.c.l.b16 %v1681
  %v1746 = vunpack.c.l.b16 %v1682
  %v1747 = vunpack.c.l.b16 %v1683
  %v1748 = vunpack.c.l.b16 %v1684
  %v1749 = vunpack.c.l.b16 %v1685
  %v1750 = vunpack.c.l.b16 %v1686
  %v1751 = vpack.c.b16 %v1720, %v1719
  %v1752 = vpack.c.b16 %v1722, %v1721
  %v1753 = vpack.c.b16 %v1724, %v1723
  %v1754 = vpack.c.b16 %v1726, %v1725
  %v1755 = vpack.c.b16 %v1728, %v1727
  %v1756 = vpack.c.b16 %v1730, %v1729
  %v1757 = vpack.c.b16 %v1732, %v1731
  %v1758 = vpack.c.b16 %v1734, %v1733
  %v1759 = vpack.c.b16 %v1736, %v1735
  %v1760 = vpack.c.b16 %v1738, %v1737
  %v1761 = vpack.c.b16 %v1740, %v1739
  %v1762 = vpack.c.b16 %v1742, %v1741
  %v1763 = vpack.c.b16 %v1744, %v1743
  %v1764 = vpack.c.b16 %v1746, %v1745
  %v1765 = vpack.c.b16 %v1748, %v1747
  %v1766 = vpack.c.b16 %v1750, %v1749
  %1783 = vmatprep.subr.bf16.mxu0 0
  %1784 = vmatpush1.bf16.msra.mxu0 %v1751
  %1785 = vmatprep.subr.bf16.mxu0 0
  %1786 = vmatpush1.bf16.msra.mxu0 %v1752
  %1787 = vmatprep.subr.bf16.mxu0 0
  %1788 = vmatpush1.bf16.msra.mxu0 %v1753
  %1789 = vmatprep.subr.bf16.mxu0 0
  %1790 = vmatpush1.bf16.msra.mxu0 %v1754
  %1791 = vmatprep.subr.bf16.mxu0 0
  %1792 = vmatpush1.bf16.msra.mxu0 %v1755
  %1793 = vmatprep.subr.bf16.mxu0 0
  %1794 = vmatpush1.bf16.msra.mxu0 %v1756
  %1795 = vmatprep.subr.bf16.mxu0 0
  %1796 = vmatpush1.bf16.msra.mxu0 %v1757
  %1797 = vmatprep.subr.bf16.mxu0 0
  %1798 = vmatpush1.bf16.msra.mxu0 %v1758
  %1799 = vmatprep.subr.bf16.mxu0 0
  %1800 = vmatpush1.bf16.msra.mxu0 %v1759
  %1801 = vmatprep.subr.bf16.mxu0 0
  %1802 = vmatpush1.bf16.msra.mxu0 %v1760
  %1803 = vmatprep.subr.bf16.mxu0 0
  %1804 = vmatpush1.bf16.msra.mxu0 %v1761
  %1805 = vmatprep.subr.bf16.mxu0 0
  %1806 = vmatpush1.bf16.msra.mxu0 %v1762
  %1807 = vmatprep.subr.bf16.mxu0 0
  %1808 = vmatpush1.bf16.msra.mxu0 %v1763
  %1809 = vmatprep.subr.bf16.mxu0 0
  %1810 = vmatpush1.bf16.msra.mxu0 %v1764
  %1811 = vmatprep.subr.bf16.mxu0 0
  %1812 = vmatpush1.bf16.msra.mxu0 %v1765
  %1813 = vmatprep.subr.bf16.mxu0 0
  %1814 = vmatpush1.bf16.msra.mxu0 %v1766
  %1815 = vmatprep.mubr.bf16.mxu0 %v1624
  %1816 = vmatmul.mubr.bf16.gmra.mrb[0].mxu0 %v1623
  %v1817 = vpop.f32.mrb[0].mxu0
  %v1818 = vadd.f32 0.0, %v1817
  %v1819 = vpop.f32.mrb[0].mxu0
  %v1820 = vpop.f32.mrb[0].mxu0
  %v1821 = vadd.f32 0.0, %v1820
  %v1822 = vpop.f32.mrb[0].mxu0
  %1823 = vmatprep.mubr.bf16.mxu0 %v1626
  %1824 = vmatmul.mubr.bf16.gmra.mrb[0].mxu0 %v1625
  %v1825 = vpop.f32.mrb[0].mxu0
  %v1826 = vadd.f32 0.0, %v1825
  %v1827 = vpop.f32.mrb[0].mxu0
  %v1828 = vpop.f32.mrb[0].mxu0
  %v1829 = vadd.f32 0.0, %v1828
  %v1830 = vpop.f32.mrb[0].mxu0
  %1831 = vmatprep.mubr.bf16.mxu0 %v1628
  %1832 = vmatmul.mubr.bf16.gmra.mrb[0].mxu0 %v1627
  %v1833 = vpop.f32.mrb[0].mxu0
  %v1834 = vadd.f32 0.0, %v1833
  %v1835 = vpop.f32.mrb[0].mxu0
  %v1836 = vpop.f32.mrb[0].mxu0
  %v1837 = vadd.f32 0.0, %v1836
  %v1838 = vpop.f32.mrb[0].mxu0
  %1839 = vmatprep.mubr.bf16.mxu0 %v1630
  %1840 = vmatmul.mubr.bf16.gmra.mrb[0].mxu0 %v1629
  %v1841 = vpop.f32.mrb[0].mxu0
  %v1842 = vadd.f32 0.0, %v1841
  %v1843 = vpop.f32.mrb[0].mxu0
  %v1844 = vpop.f32.mrb[0].mxu0
  %v1845 = vadd.f32 0.0, %v1844
  %v1846 = vpop.f32.mrb[0].mxu0
  %1847 = vmatprep.mubr.bf16.mxu0 %v1632
  %1848 = vmatmul.mubr.bf16.gmra.mrb[0].mxu0 %v1631
  %v1849 = vpop.f32.mrb[0].mxu0
  %v1850 = vadd.f32 0.0, %v1849
  %v1851 = vpop.f32.mrb[0].mxu0
  %v1852 = vpop.f32.mrb[0].mxu0
  %v1853 = vadd.f32 0.0, %v1852
  %v1854 = vpop.f32.mrb[0].mxu0
  %1855 = vmatprep.mubr.bf16.mxu0 %v1634
  %1856 = vmatmul.mubr.bf16.gmra.mrb[0].mxu0 %v1633
  %v1857 = vpop.f32.mrb[0].mxu0
  %v1858 = vadd.f32 0.0, %v1857
  %v1859 = vpop.f32.mrb[0].mxu0
  %v1860 = vpop.f32.mrb[0].mxu0
  %v1861 = vadd.f32 0.0, %v1860
  %v1862 = vpop.f32.mrb[0].mxu0
  %1863 = vmatprep.mubr.bf16.mxu0 %v1636
  %1864 = vmatmul.mubr.bf16.gmra.mrb[0].mxu0 %v1635
  %v1865 = vpop.f32.mrb[0].mxu0
  %v1866 = vadd.f32 0.0, %v1865
  %v1867 = vpop.f32.mrb[0].mxu0
  %v1868 = vpop.f32.mrb[0].mxu0
  %v1869 = vadd.f32 0.0, %v1868
  %v1870 = vpop.f32.mrb[0].mxu0
  %1871 = vmatprep.mubr.bf16.mxu0 %v1638
  %1872 = vmatmul.mubr.bf16.gmra.mrb[0].mxu0 %v1637
  %v1873 = vpop.f32.mrb[0].mxu0
  %v1874 = vadd.f32 0.0, %v1873
  %v1875 = vpop.f32.mrb[0].mxu0
  %v1876 = vpop.f32.mrb[0].mxu0
  %v1877 = vadd.f32 0.0, %v1876
  %v1878 = vpop.f32.mrb[0].mxu0
  %1879 = vmatprep.mubr.bf16.mxu0 %v1640
  %1880 = vmatmul.mubr.bf16.gmra.mrb[0].mxu0 %v1639
  %v1881 = vpop.f32.mrb[0].mxu0
  %v1882 = vadd.f32 0.0, %v1881
  %v1883 = vpop.f32.mrb[0].mxu0
  %v1884 = vpop.f32.mrb[0].mxu0
  %v1885 = vadd.f32 0.0, %v1884
  %v1886 = vpop.f32.mrb[0].mxu0
  %1887 = vmatprep.mubr.bf16.mxu0 %v1642
  %1888 = vmatmul.mubr.bf16.gmra.mrb[0].mxu0 %v1641
  %v1889 = vpop.f32.mrb[0].mxu0
  %v1890 = vadd.f32 0.0, %v1889
  %v1891 = vpop.f32.mrb[0].mxu0
  %v1892 = vpop.f32.mrb[0].mxu0
  %v1893 = vadd.f32 0.0, %v1892
  %v1894 = vpop.f32.mrb[0].mxu0
  %1895 = vmatprep.mubr.bf16.mxu0 %v1644
  %1896 = vmatmul.mubr.bf16.gmra.mrb[0].mxu0 %v1643
  %v1897 = vpop.f32.mrb[0].mxu0
  %v1898 = vadd.f32 0.0, %v1897
  %v1899 = vpop.f32.mrb[0].mxu0
  %v1900 = vpop.f32.mrb[0].mxu0
  %v1901 = vadd.f32 0.0, %v1900
  %v1902 = vpop.f32.mrb[0].mxu0
  %1903 = vmatprep.mubr.bf16.mxu0 %v1646
  %1904 = vmatmul.mubr.bf16.gmra.mrb[0].mxu0 %v1645
  %v1905 = vpop.f32.mrb[0].mxu0
  %v1906 = vadd.f32 0.0, %v1905
  %v1907 = vpop.f32.mrb[0].mxu0
  %v1908 = vpop.f32.mrb[0].mxu0
  %v1909 = vadd.f32 0.0, %v1908
  %v1910 = vpop.f32.mrb[0].mxu0
  %1911 = vmatprep.mubr.bf16.mxu0 %v1648
  %1912 = vmatmul.mubr.bf16.gmra.mrb[0].mxu0 %v1647
  %v1913 = vpop.f32.mrb[0].mxu0
  %v1914 = vadd.f32 0.0, %v1913
  %v1915 = vpop.f32.mrb[0].mxu0
  %v1916 = vpop.f32.mrb[0].mxu0
  %v1917 = vadd.f32 0.0, %v1916
  %v1918 = vpop.f32.mrb[0].mxu0
  %1919 = vmatprep.mubr.bf16.mxu0 %v1650
  %1920 = vmatmul.mubr.bf16.gmra.mrb[0].mxu0 %v1649
  %v1921 = vpop.f32.mrb[0].mxu0
  %v1922 = vadd.f32 0.0, %v1921
  %v1923 = vpop.f32.mrb[0].mxu0
  %v1924 = vpop.f32.mrb[0].mxu0
  %v1925 = vadd.f32 0.0, %v1924
  %v1926 = vpop.f32.mrb[0].mxu0
  %1927 = vmatprep.mubr.bf16.mxu0 %v1652
  %1928 = vmatmul.mubr.bf16.gmra.mrb[0].mxu0 %v1651
  %v1929 = vpop.f32.mrb[0].mxu0
  %v1930 = vadd.f32 0.0, %v1929
  %v1931 = vpop.f32.mrb[0].mxu0
  %v1932 = vpop.f32.mrb[0].mxu0
  %v1933 = vadd.f32 0.0, %v1932
  %v1934 = vpop.f32.mrb[0].mxu0
  %1935 = vmatprep.mubr.bf16.mxu0 %v1654
  %1936 = vmatmul.mubr.bf16.gmra.mrb[0].mxu0 %v1653
  %v1937 = vpop.f32.mrb[0].mxu0
  %v1938 = vadd.f32 0.0, %v1937
  %v1939 = vpop.f32.mrb[0].mxu0
  %v1940 = vpop.f32.mrb[0].mxu0
  %v1941 = vadd.f32 0.0, %v1940
  %v1942 = vpop.f32.mrb[0].mxu0
  %1943 = vdwg.mxu0
  %v1944 = vpack.c.bf16 %v1821, %v1818
  %v1945 = vpack.c.bf16 %v1829, %v1826
  %v1946 = vpack.c.bf16 %v1837, %v1834
  %v1947 = vpack.c.bf16 %v1845, %v1842
  %v1948 = vpack.c.bf16 %v1853, %v1850
  %v1949 = vpack.c.bf16 %v1861, %v1858
  %v1950 = vpack.c.bf16 %v1869, %v1866
  %v1951 = vpack.c.bf16 %v1877, %v1874
  %v1952 = vpack.c.bf16 %v1885, %v1882
  %v1953 = vpack.c.bf16 %v1893, %v1890
  %v1954 = vpack.c.bf16 %v1901, %v1898
  %v1955 = vpack.c.bf16 %v1909, %v1906
  %v1956 = vpack.c.bf16 %v1917, %v1914
  %v1957 = vpack.c.bf16 %v1925, %v1922
  %v1958 = vpack.c.bf16 %v1933, %v1930
  %v1959 = vpack.c.bf16 %v1941, %v1938
  %v1960 = vld [vmem:[%s7] sm:$0x1]
  %v1962 = vlaneseq
  %v1963 = vshrl.u32 %v1962, 7
  %v1964 = vsub.s32 0, %v1963
  %v1965 = vrot.slane %v1960, %v1964
  %1967 = vmatprep.subr.bf16.mxu0 0
  %1968 = vmatpush1.bf16.msra.mxu0 %v1944
  %1969 = vmatprep.subr.bf16.mxu0 0
  %1970 = vmatpush1.bf16.msra.mxu0 %v1945
  %1971 = vmatprep.subr.bf16.mxu0 0
  %1972 = vmatpush1.bf16.msra.mxu0 %v1946
  %1973 = vmatprep.subr.bf16.mxu0 0
  %1974 = vmatpush1.bf16.msra.mxu0 %v1947
  %1975 = vmatprep.subr.bf16.mxu0 0
  %1976 = vmatpush1.bf16.msra.mxu0 %v1948
  %1977 = vmatprep.subr.bf16.mxu0 0
  %1978 = vmatpush1.bf16.msra.mxu0 %v1949
  %1979 = vmatprep.subr.bf16.mxu0 0
  %1980 = vmatpush1.bf16.msra.mxu0 %v1950
  %1981 = vmatprep.subr.bf16.mxu0 0
  %1982 = vmatpush1.bf16.msra.mxu0 %v1951
  %1983 = vmatprep.subr.bf16.mxu0 0
  %1984 = vmatpush1.bf16.msra.mxu0 %v1952
  %1985 = vmatprep.subr.bf16.mxu0 0
  %1986 = vmatpush1.bf16.msra.mxu0 %v1953
  %1987 = vmatprep.subr.bf16.mxu0 0
  %1988 = vmatpush1.bf16.msra.mxu0 %v1954
  %1989 = vmatprep.subr.bf16.mxu0 0
  %1990 = vmatpush1.bf16.msra.mxu0 %v1955
  %1991 = vmatprep.subr.bf16.mxu0 0
  %1992 = vmatpush1.bf16.msra.mxu0 %v1956
  %1993 = vmatprep.subr.bf16.mxu0 0
  %1994 = vmatpush1.bf16.msra.mxu0 %v1957
  %1995 = vmatprep.subr.bf16.mxu0 0
  %1996 = vmatpush1.bf16.msra.mxu0 %v1958
  %1997 = vmatprep.subr.bf16.mxu0 0
  %1998 = vmatpush1.bf16.msra.mxu0 %v1959
  %1999 = vmatprep.mubr.bf16.mxu0 %v1227
  %2000 = vmatmul.mubr.bf16.gmra.mrb[0].mxu0 %v1226
  %v2001 = vpop.f32.mrb[0].mxu0
  %v2002 = vadd.f32 %v1965, %v2001
  %v2003 = vpop.f32.mrb[0].mxu0
  %v2004 = vpop.f32.mrb[0].mxu0
  %v2005 = vadd.f32 %v1965, %v2004
  %v2006 = vpop.f32.mrb[0].mxu0
  %2007 = vmatprep.mubr.bf16.mxu0 %v1229
  %2008 = vmatmul.mubr.bf16.gmra.mrb[0].mxu0 %v1228
  %v2009 = vpop.f32.mrb[0].mxu0
  %v2010 = vadd.f32 %v1965, %v2009
  %v2011 = vpop.f32.mrb[0].mxu0
  %v2012 = vpop.f32.mrb[0].mxu0
  %v2013 = vadd.f32 %v1965, %v2012
  %v2014 = vpop.f32.mrb[0].mxu0
  %2015 = vmatprep.mubr.bf16.mxu0 %v1231
  %2016 = vmatmul.mubr.bf16.gmra.mrb[0].mxu0 %v1230
  %v2017 = vpop.f32.mrb[0].mxu0
  %v2018 = vadd.f32 %v1965, %v2017
  %v2019 = vpop.f32.mrb[0].mxu0
  %v2020 = vpop.f32.mrb[0].mxu0
  %v2021 = vadd.f32 %v1965, %v2020
  %v2022 = vpop.f32.mrb[0].mxu0
  %2023 = vmatprep.mubr.bf16.mxu0 %v1233
  %2024 = vmatmul.mubr.bf16.gmra.mrb[0].mxu0 %v1232
  %v2025 = vpop.f32.mrb[0].mxu0
  %v2026 = vadd.f32 %v1965, %v2025
  %v2027 = vpop.f32.mrb[0].mxu0
  %v2028 = vpop.f32.mrb[0].mxu0
  %v2029 = vadd.f32 %v1965, %v2028
  %v2030 = vpop.f32.mrb[0].mxu0
  %2031 = vmatprep.mubr.bf16.mxu0 %v1235
  %2032 = vmatmul.mubr.bf16.gmra.mrb[0].mxu0 %v1234
  %v2033 = vpop.f32.mrb[0].mxu0
  %v2034 = vadd.f32 %v1965, %v2033
  %v2035 = vpop.f32.mrb[0].mxu0
  %v2036 = vpop.f32.mrb[0].mxu0
  %v2037 = vadd.f32 %v1965, %v2036
  %v2038 = vpop.f32.mrb[0].mxu0
  %2039 = vmatprep.mubr.bf16.mxu0 %v1237
  %2040 = vmatmul.mubr.bf16.gmra.mrb[0].mxu0 %v1236
  %v2041 = vpop.f32.mrb[0].mxu0
  %v2042 = vadd.f32 %v1965, %v2041
  %v2043 = vpop.f32.mrb[0].mxu0
  %v2044 = vpop.f32.mrb[0].mxu0
  %v2045 = vadd.f32 %v1965, %v2044
  %v2046 = vpop.f32.mrb[0].mxu0
  %2047 = vmatprep.mubr.bf16.mxu0 %v1239
  %2048 = vmatmul.mubr.bf16.gmra.mrb[0].mxu0 %v1238
  %v2049 = vpop.f32.mrb[0].mxu0
  %v2050 = vadd.f32 %v1965, %v2049
  %v2051 = vpop.f32.mrb[0].mxu0
  %v2052 = vpop.f32.mrb[0].mxu0
  %v2053 = vadd.f32 %v1965, %v2052
  %v2054 = vpop.f32.mrb[0].mxu0
  %2055 = vmatprep.mubr.bf16.mxu0 %v1241
  %2056 = vmatmul.mubr.bf16.gmra.mrb[0].mxu0 %v1240
  %v2057 = vpop.f32.mrb[0].mxu0
  %v2058 = vadd.f32 %v1965, %v2057
  %v2059 = vpop.f32.mrb[0].mxu0
  %v2060 = vpop.f32.mrb[0].mxu0
  %v2061 = vadd.f32 %v1965, %v2060
  %v2062 = vpop.f32.mrb[0].mxu0
  %2063 = vmatprep.mubr.bf16.mxu0 %v1243
  %2064 = vmatmul.mubr.bf16.gmra.mrb[0].mxu0 %v1242
  %v2065 = vpop.f32.mrb[0].mxu0
  %v2066 = vadd.f32 %v1965, %v2065
  %v2067 = vpop.f32.mrb[0].mxu0
  %v2068 = vpop.f32.mrb[0].mxu0
  %v2069 = vadd.f32 %v1965, %v2068
  %v2070 = vpop.f32.mrb[0].mxu0
  %2071 = vmatprep.mubr.bf16.mxu0 %v1245
  %2072 = vmatmul.mubr.bf16.gmra.mrb[0].mxu0 %v1244
  %v2073 = vpop.f32.mrb[0].mxu0
  %v2074 = vadd.f32 %v1965, %v2073
  %v2075 = vpop.f32.mrb[0].mxu0
  %v2076 = vpop.f32.mrb[0].mxu0
  %v2077 = vadd.f32 %v1965, %v2076
  %v2078 = vpop.f32.mrb[0].mxu0
  %2079 = vmatprep.mubr.bf16.mxu0 %v1247
  %2080 = vmatmul.mubr.bf16.gmra.mrb[0].mxu0 %v1246
  %v2081 = vpop.f32.mrb[0].mxu0
  %v2082 = vadd.f32 %v1965, %v2081
  %v2083 = vpop.f32.mrb[0].mxu0
  %v2084 = vpop.f32.mrb[0].mxu0
  %v2085 = vadd.f32 %v1965, %v2084
  %v2086 = vpop.f32.mrb[0].mxu0
  %2087 = vmatprep.mubr.bf16.mxu0 %v1249
  %2088 = vmatmul.mubr.bf16.gmra.mrb[0].mxu0 %v1248
  %v2089 = vpop.f32.mrb[0].mxu0
  %v2090 = vadd.f32 %v1965, %v2089
  %v2091 = vpop.f32.mrb[0].mxu0
  %v2092 = vpop.f32.mrb[0].mxu0
  %v2093 = vadd.f32 %v1965, %v2092
  %v2094 = vpop.f32.mrb[0].mxu0
  %2095 = vmatprep.mubr.bf16.mxu0 %v1251
  %2096 = vmatmul.mubr.bf16.gmra.mrb[0].mxu0 %v1250
  %v2097 = vpop.f32.mrb[0].mxu0
  %v2098 = vadd.f32 %v1965, %v2097
  %v2099 = vpop.f32.mrb[0].mxu0
  %v2100 = vpop.f32.mrb[0].mxu0
  %v2101 = vadd.f32 %v1965, %v2100
  %v2102 = vpop.f32.mrb[0].mxu0
  %2103 = vmatprep.mubr.bf16.mxu0 %v1253
  %2104 = vmatmul.mubr.bf16.gmra.mrb[0].mxu0 %v1252
  %v2105 = vpop.f32.mrb[0].mxu0
  %v2106 = vadd.f32 %v1965, %v2105
  %v2107 = vpop.f32.mrb[0].mxu0
  %v2108 = vpop.f32.mrb[0].mxu0
  %v2109 = vadd.f32 %v1965, %v2108
  %v2110 = vpop.f32.mrb[0].mxu0
  %2111 = vmatprep.mubr.bf16.mxu0 %v1255
  %2112 = vmatmul.mubr.bf16.gmra.mrb[0].mxu0 %v1254
  %v2113 = vpop.f32.mrb[0].mxu0
  %v2114 = vadd.f32 %v1965, %v2113
  %v2115 = vpop.f32.mrb[0].mxu0
  %v2116 = vpop.f32.mrb[0].mxu0
  %v2117 = vadd.f32 %v1965, %v2116
  %v2118 = vpop.f32.mrb[0].mxu0
  %2119 = vmatprep.mubr.bf16.mxu0 %v1257
  %2120 = vmatmul.mubr.bf16.gmra.mrb[0].mxu0 %v1256
  %v2121 = vpop.f32.mrb[0].mxu0
  %v2122 = vadd.f32 %v1965, %v2121
  %v2123 = vpop.f32.mrb[0].mxu0
  %v2124 = vpop.f32.mrb[0].mxu0
  %v2125 = vadd.f32 %v1965, %v2124
  %v2126 = vpop.f32.mrb[0].mxu0
  %2127 = vdwg.mxu0
  %v2128 = vmax.f32 %v2002, 0.0
  %v2129 = vmax.f32 %v2005, 0.0
  %v2130 = vmax.f32 %v2010, 0.0
  %v2131 = vmax.f32 %v2013, 0.0
  %v2132 = vmax.f32 %v2018, 0.0
  %v2133 = vmax.f32 %v2021, 0.0
  %v2134 = vmax.f32 %v2026, 0.0
  %v2135 = vmax.f32 %v2029, 0.0
  %v2136 = vmax.f32 %v2034, 0.0
  %v2137 = vmax.f32 %v2037, 0.0
  %v2138 = vmax.f32 %v2042, 0.0
  %v2139 = vmax.f32 %v2045, 0.0
  %v2140 = vmax.f32 %v2050, 0.0
  %v2141 = vmax.f32 %v2053, 0.0
  %v2142 = vmax.f32 %v2058, 0.0
  %v2143 = vmax.f32 %v2061, 0.0
  %v2144 = vmax.f32 %v2066, 0.0
  %v2145 = vmax.f32 %v2069, 0.0
  %v2146 = vmax.f32 %v2074, 0.0
  %v2147 = vmax.f32 %v2077, 0.0
  %v2148 = vmax.f32 %v2082, 0.0
  %v2149 = vmax.f32 %v2085, 0.0
  %v2150 = vmax.f32 %v2090, 0.0
  %v2151 = vmax.f32 %v2093, 0.0
  %v2152 = vmax.f32 %v2098, 0.0
  %v2153 = vmax.f32 %v2101, 0.0
  %v2154 = vmax.f32 %v2106, 0.0
  %v2155 = vmax.f32 %v2109, 0.0
  %v2156 = vmax.f32 %v2114, 0.0
  %v2157 = vmax.f32 %v2117, 0.0
  %v2158 = vmax.f32 %v2122, 0.0
  %v2159 = vmax.f32 %v2125, 0.0
  %v2160 = vld [vmem:[%s8] sm:$0x1]
  %v2162 = vlaneseq
  %v2163 = vshrl.u32 %v2162, 7
  %v2164 = vsub.s32 0, %v2163
  %v2165 = vrot.slane %v2160, %v2164
  %v2167 = vadd.f32 %v2128, %v2165
  %v2168 = vadd.f32 %v2129, %v2165
  %v2169 = vadd.f32 %v2130, %v2165
  %v2170 = vadd.f32 %v2131, %v2165
  %v2171 = vadd.f32 %v2132, %v2165
  %v2172 = vadd.f32 %v2133, %v2165
  %v2173 = vadd.f32 %v2134, %v2165
  %v2174 = vadd.f32 %v2135, %v2165
  %v2175 = vadd.f32 %v2136, %v2165
  %v2176 = vadd.f32 %v2137, %v2165
  %v2177 = vadd.f32 %v2138, %v2165
  %v2178 = vadd.f32 %v2139, %v2165
  %v2179 = vadd.f32 %v2140, %v2165
  %v2180 = vadd.f32 %v2141, %v2165
  %v2181 = vadd.f32 %v2142, %v2165
  %v2182 = vadd.f32 %v2143, %v2165
  %v2183 = vadd.f32 %v2144, %v2165
  %v2184 = vadd.f32 %v2145, %v2165
  %v2185 = vadd.f32 %v2146, %v2165
  %v2186 = vadd.f32 %v2147, %v2165
  %v2187 = vadd.f32 %v2148, %v2165
  %v2188 = vadd.f32 %v2149, %v2165
  %v2189 = vadd.f32 %v2150, %v2165
  %v2190 = vadd.f32 %v2151, %v2165
  %v2191 = vadd.f32 %v2152, %v2165
  %v2192 = vadd.f32 %v2153, %v2165
  %v2193 = vadd.f32 %v2154, %v2165
  %v2194 = vadd.f32 %v2155, %v2165
  %v2195 = vadd.f32 %v2156, %v2165
  %v2196 = vadd.f32 %v2157, %v2165
  %v2197 = vadd.f32 %v2158, %v2165
  %v2198 = vadd.f32 %v2159, %v2165
  %v2199 = vpack.c.bf16 %v2168, %v2167
  %v2200 = vpack.c.bf16 %v2170, %v2169
  %v2201 = vpack.c.bf16 %v2172, %v2171
  %v2202 = vpack.c.bf16 %v2174, %v2173
  %v2203 = vpack.c.bf16 %v2176, %v2175
  %v2204 = vpack.c.bf16 %v2178, %v2177
  %v2205 = vpack.c.bf16 %v2180, %v2179
  %v2206 = vpack.c.bf16 %v2182, %v2181
  %v2207 = vpack.c.bf16 %v2184, %v2183
  %v2208 = vpack.c.bf16 %v2186, %v2185
  %v2209 = vpack.c.bf16 %v2188, %v2187
  %v2210 = vpack.c.bf16 %v2190, %v2189
  %v2211 = vpack.c.bf16 %v2192, %v2191
  %v2212 = vpack.c.bf16 %v2194, %v2193
  %v2213 = vpack.c.bf16 %v2196, %v2195
  %v2214 = vpack.c.bf16 %v2198, %v2197
  %v2215 = vld [vmem:[%s9] sm:$0xf]
  %v2216 = vld [vmem:[%s9 + $0x4] sm:$0xf]
  %v2217 = vld [vmem:[%s9 + $0x8] sm:$0xf]
  %v2218 = vld [vmem:[%s9 + $0xc] sm:$0xf]
  %v2219 = vld [vmem:[%s9 + $0x10] sm:$0xf]
  %v2220 = vld [vmem:[%s9 + $0x14] sm:$0xf]
  %v2221 = vld [vmem:[%s9 + $0x18] sm:$0xf]
  %v2222 = vld [vmem:[%s9 + $0x1c] sm:$0xf]
  %v2223 = vld [vmem:[%s9 + $0x20] sm:$0xf]
  %v2224 = vld [vmem:[%s9 + $0x24] sm:$0xf]
  %v2225 = vld [vmem:[%s9 + $0x28] sm:$0xf]
  %v2226 = vld [vmem:[%s9 + $0x2c] sm:$0xf]
  %v2227 = vld [vmem:[%s9 + $0x30] sm:$0xf]
  %v2228 = vld [vmem:[%s9 + $0x34] sm:$0xf]
  %v2229 = vld [vmem:[%s9 + $0x38] sm:$0xf]
  %v2230 = vld [vmem:[%s9 + $0x3c] sm:$0xf]
  %v2247 = vunpack.c.l.b16 %v2215
  %v2248 = vunpack.c.l.b16 %v2216
  %v2249 = vunpack.c.l.b16 %v2217
  %v2250 = vunpack.c.l.b16 %v2218
  %v2251 = vunpack.c.l.b16 %v2219
  %v2252 = vunpack.c.l.b16 %v2220
  %v2253 = vunpack.c.l.b16 %v2221
  %v2254 = vunpack.c.l.b16 %v2222
  %v2255 = vunpack.c.l.b16 %v2223
  %v2256 = vunpack.c.l.b16 %v2224
  %v2257 = vunpack.c.l.b16 %v2225
  %v2258 = vunpack.c.l.b16 %v2226
  %v2259 = vunpack.c.l.b16 %v2227
  %v2260 = vunpack.c.l.b16 %v2228
  %v2261 = vunpack.c.l.b16 %v2229
  %v2262 = vunpack.c.l.b16 %v2230
  %v2263 = vpack.c.b16 %v2248, %v2247
  %v2264 = vpack.c.b16 %v2250, %v2249
  %v2265 = vpack.c.b16 %v2252, %v2251
  %v2266 = vpack.c.b16 %v2254, %v2253
  %v2267 = vpack.c.b16 %v2256, %v2255
  %v2268 = vpack.c.b16 %v2258, %v2257
  %v2269 = vpack.c.b16 %v2260, %v2259
  %v2270 = vpack.c.b16 %v2262, %v2261
  %2279 = vmatprep.subr.bf16.mxu0 0
  %2280 = vmatpush1.bf16.msra.mxu0 %v2263
  %2281 = vmatprep.subr.bf16.mxu0 0
  %2282 = vmatpush1.bf16.msra.mxu0 %v2264
  %2283 = vmatprep.subr.bf16.mxu0 0
  %2284 = vmatpush1.bf16.msra.mxu0 %v2265
  %2285 = vmatprep.subr.bf16.mxu0 0
  %2286 = vmatpush1.bf16.msra.mxu0 %v2266
  %2287 = vmatprep.subr.bf16.mxu0 0
  %2288 = vmatpush1.bf16.msra.mxu0 %v2267
  %2289 = vmatprep.subr.bf16.mxu0 0
  %2290 = vmatpush1.bf16.msra.mxu0 %v2268
  %2291 = vmatprep.subr.bf16.mxu0 0
  %2292 = vmatpush1.bf16.msra.mxu0 %v2269
  %2293 = vmatprep.subr.bf16.mxu0 0
  %2294 = vmatpush1.bf16.msra.mxu0 %v2270
  %2295 = vmatprep.subr.bf16.mxu0 0
  %2296 = vmatpush1.bf16.msra.mxu0 0
  %2297 = vmatprep.subr.bf16.mxu0 0
  %2298 = vmatpush1.bf16.msra.mxu0 0
  %2299 = vmatprep.subr.bf16.mxu0 0
  %2300 = vmatpush1.bf16.msra.mxu0 0
  %2301 = vmatprep.subr.bf16.mxu0 0
  %2302 = vmatpush1.bf16.msra.mxu0 0
  %2303 = vmatprep.subr.bf16.mxu0 0
  %2304 = vmatpush1.bf16.msra.mxu0 0
  %2305 = vmatprep.subr.bf16.mxu0 0
  %2306 = vmatpush1.bf16.msra.mxu0 0
  %2307 = vmatprep.subr.bf16.mxu0 0
  %2308 = vmatpush1.bf16.msra.mxu0 0
  %2309 = vmatprep.subr.bf16.mxu0 0
  %2310 = vmatpush1.bf16.msra.mxu0 0
  %2311 = vmatprep.mubr.bf16.mxu0 0
  %2312 = vmatmul.mubr.bf16.gmra.mrb[0].mxu0 %v2199
  %v2313 = vpop.f32.mrb[0].mxu0
  %v2314 = vadd.f32 0.0, %v2313
  %v2315 = vpop.f32.mrb[0].mxu0
  %v2316 = vpop.f32.mrb[0].mxu0
  %v2317 = vadd.f32 0.0, %v2316
  %v2318 = vpop.f32.mrb[0].mxu0
  %2319 = vmatprep.mubr.bf16.mxu0 0
  %2320 = vmatmul.mubr.bf16.gmra.mrb[0].mxu0 %v2200
  %v2321 = vpop.f32.mrb[0].mxu0
  %v2322 = vadd.f32 0.0, %v2321
  %v2323 = vpop.f32.mrb[0].mxu0
  %v2324 = vpop.f32.mrb[0].mxu0
  %v2325 = vadd.f32 0.0, %v2324
  %v2326 = vpop.f32.mrb[0].mxu0
  %2327 = vmatprep.mubr.bf16.mxu0 0
  %2328 = vmatmul.mubr.bf16.gmra.mrb[0].mxu0 %v2201
  %v2329 = vpop.f32.mrb[0].mxu0
  %v2330 = vadd.f32 0.0, %v2329
  %v2331 = vpop.f32.mrb[0].mxu0
  %v2332 = vpop.f32.mrb[0].mxu0
  %v2333 = vadd.f32 0.0, %v2332
  %v2334 = vpop.f32.mrb[0].mxu0
  %2335 = vmatprep.mubr.bf16.mxu0 0
  %2336 = vmatmul.mubr.bf16.gmra.mrb[0].mxu0 %v2202
  %v2337 = vpop.f32.mrb[0].mxu0
  %v2338 = vadd.f32 0.0, %v2337
  %v2339 = vpop.f32.mrb[0].mxu0
  %v2340 = vpop.f32.mrb[0].mxu0
  %v2341 = vadd.f32 0.0, %v2340
  %v2342 = vpop.f32.mrb[0].mxu0
  %2343 = vmatprep.mubr.bf16.mxu0 0
  %2344 = vmatmul.mubr.bf16.gmra.mrb[0].mxu0 %v2203
  %v2345 = vpop.f32.mrb[0].mxu0
  %v2346 = vadd.f32 0.0, %v2345
  %v2347 = vpop.f32.mrb[0].mxu0
  %v2348 = vpop.f32.mrb[0].mxu0
  %v2349 = vadd.f32 0.0, %v2348
  %v2350 = vpop.f32.mrb[0].mxu0
  %2351 = vmatprep.mubr.bf16.mxu0 0
  %2352 = vmatmul.mubr.bf16.gmra.mrb[0].mxu0 %v2204
  %v2353 = vpop.f32.mrb[0].mxu0
  %v2354 = vadd.f32 0.0, %v2353
  %v2355 = vpop.f32.mrb[0].mxu0
  %v2356 = vpop.f32.mrb[0].mxu0
  %v2357 = vadd.f32 0.0, %v2356
  %v2358 = vpop.f32.mrb[0].mxu0
  %2359 = vmatprep.mubr.bf16.mxu0 0
  %2360 = vmatmul.mubr.bf16.gmra.mrb[0].mxu0 %v2205
  %v2361 = vpop.f32.mrb[0].mxu0
  %v2362 = vadd.f32 0.0, %v2361
  %v2363 = vpop.f32.mrb[0].mxu0
  %v2364 = vpop.f32.mrb[0].mxu0
  %v2365 = vadd.f32 0.0, %v2364
  %v2366 = vpop.f32.mrb[0].mxu0
  %2367 = vmatprep.mubr.bf16.mxu0 0
  %2368 = vmatmul.mubr.bf16.gmra.mrb[0].mxu0 %v2206
  %v2369 = vpop.f32.mrb[0].mxu0
  %v2370 = vadd.f32 0.0, %v2369
  %v2371 = vpop.f32.mrb[0].mxu0
  %v2372 = vpop.f32.mrb[0].mxu0
  %v2373 = vadd.f32 0.0, %v2372
  %v2374 = vpop.f32.mrb[0].mxu0
  %2375 = vmatprep.mubr.bf16.mxu0 0
  %2376 = vmatmul.mubr.bf16.gmra.mrb[0].mxu0 %v2207
  %v2377 = vpop.f32.mrb[0].mxu0
  %v2378 = vadd.f32 0.0, %v2377
  %v2379 = vpop.f32.mrb[0].mxu0
  %v2380 = vpop.f32.mrb[0].mxu0
  %v2381 = vadd.f32 0.0, %v2380
  %v2382 = vpop.f32.mrb[0].mxu0
  %2383 = vmatprep.mubr.bf16.mxu0 0
  %2384 = vmatmul.mubr.bf16.gmra.mrb[0].mxu0 %v2208
  %v2385 = vpop.f32.mrb[0].mxu0
  %v2386 = vadd.f32 0.0, %v2385
  %v2387 = vpop.f32.mrb[0].mxu0
  %v2388 = vpop.f32.mrb[0].mxu0
  %v2389 = vadd.f32 0.0, %v2388
  %v2390 = vpop.f32.mrb[0].mxu0
  %2391 = vmatprep.mubr.bf16.mxu0 0
  %2392 = vmatmul.mubr.bf16.gmra.mrb[0].mxu0 %v2209
  %v2393 = vpop.f32.mrb[0].mxu0
  %v2394 = vadd.f32 0.0, %v2393
  %v2395 = vpop.f32.mrb[0].mxu0
  %v2396 = vpop.f32.mrb[0].mxu0
  %v2397 = vadd.f32 0.0, %v2396
  %v2398 = vpop.f32.mrb[0].mxu0
  %2399 = vmatprep.mubr.bf16.mxu0 0
  %2400 = vmatmul.mubr.bf16.gmra.mrb[0].mxu0 %v2210
  %v2401 = vpop.f32.mrb[0].mxu0
  %v2402 = vadd.f32 0.0, %v2401
  %v2403 = vpop.f32.mrb[0].mxu0
  %v2404 = vpop.f32.mrb[0].mxu0
  %v2405 = vadd.f32 0.0, %v2404
  %v2406 = vpop.f32.mrb[0].mxu0
  %2407 = vmatprep.mubr.bf16.mxu0 0
  %2408 = vmatmul.mubr.bf16.gmra.mrb[0].mxu0 %v2211
  %v2409 = vpop.f32.mrb[0].mxu0
  %v2410 = vadd.f32 0.0, %v2409
  %v2411 = vpop.f32.mrb[0].mxu0
  %v2412 = vpop.f32.mrb[0].mxu0
  %v2413 = vadd.f32 0.0, %v2412
  %v2414 = vpop.f32.mrb[0].mxu0
  %2415 = vmatprep.mubr.bf16.mxu0 0
  %2416 = vmatmul.mubr.bf16.gmra.mrb[0].mxu0 %v2212
  %v2417 = vpop.f32.mrb[0].mxu0
  %v2418 = vadd.f32 0.0, %v2417
  %v2419 = vpop.f32.mrb[0].mxu0
  %v2420 = vpop.f32.mrb[0].mxu0
  %v2421 = vadd.f32 0.0, %v2420
  %v2422 = vpop.f32.mrb[0].mxu0
  %2423 = vmatprep.mubr.bf16.mxu0 0
  %2424 = vmatmul.mubr.bf16.gmra.mrb[0].mxu0 %v2213
  %v2425 = vpop.f32.mrb[0].mxu0
  %v2426 = vadd.f32 0.0, %v2425
  %v2427 = vpop.f32.mrb[0].mxu0
  %v2428 = vpop.f32.mrb[0].mxu0
  %v2429 = vadd.f32 0.0, %v2428
  %v2430 = vpop.f32.mrb[0].mxu0
  %2431 = vmatprep.mubr.bf16.mxu0 0
  %2432 = vmatmul.mubr.bf16.gmra.mrb[0].mxu0 %v2214
  %v2433 = vpop.f32.mrb[0].mxu0
  %v2434 = vadd.f32 0.0, %v2433
  %v2435 = vpop.f32.mrb[0].mxu0
  %v2436 = vpop.f32.mrb[0].mxu0
  %v2437 = vadd.f32 0.0, %v2436
  %v2438 = vpop.f32.mrb[0].mxu0
  %2439 = vdwg.mxu0
  %v2440 = vpack.c.bf16 %v2317, %v2314
  %v2441 = vpack.c.bf16 %v2325, %v2322
  %v2442 = vpack.c.bf16 %v2333, %v2330
  %v2443 = vpack.c.bf16 %v2341, %v2338
  %v2444 = vpack.c.bf16 %v2349, %v2346
  %v2445 = vpack.c.bf16 %v2357, %v2354
  %v2446 = vpack.c.bf16 %v2365, %v2362
  %v2447 = vpack.c.bf16 %v2373, %v2370
  %v2448 = vpack.c.bf16 %v2381, %v2378
  %v2449 = vpack.c.bf16 %v2389, %v2386
  %v2450 = vpack.c.bf16 %v2397, %v2394
  %v2451 = vpack.c.bf16 %v2405, %v2402
  %v2452 = vpack.c.bf16 %v2413, %v2410
  %v2453 = vpack.c.bf16 %v2421, %v2418
  %v2454 = vpack.c.bf16 %v2429, %v2426
  %v2455 = vpack.c.bf16 %v2437, %v2434
  %v2456 = vld [vmem:[%s10] sm:$0x1]
  %v2458 = vlaneseq
  %v2459 = vshrl.u32 %v2458, 7
  %v2460 = vsub.s32 0, %v2459
  %v2461 = vrot.slane %v2456, %v2460
  %2463 = vmatprep.subr.bf16.mxu0 0
  %2464 = vmatpush1.bf16.msra.mxu0 %v2440
  %2465 = vmatprep.subr.bf16.mxu0 0
  %2466 = vmatpush1.bf16.msra.mxu0 %v2441
  %2467 = vmatprep.subr.bf16.mxu0 0
  %2468 = vmatpush1.bf16.msra.mxu0 %v2442
  %2469 = vmatprep.subr.bf16.mxu0 0
  %2470 = vmatpush1.bf16.msra.mxu0 %v2443
  %2471 = vmatprep.subr.bf16.mxu0 0
  %2472 = vmatpush1.bf16.msra.mxu0 %v2444
  %2473 = vmatprep.subr.bf16.mxu0 0
  %2474 = vmatpush1.bf16.msra.mxu0 %v2445
  %2475 = vmatprep.subr.bf16.mxu0 0
  %2476 = vmatpush1.bf16.msra.mxu0 %v2446
  %2477 = vmatprep.subr.bf16.mxu0 0
  %2478 = vmatpush1.bf16.msra.mxu0 %v2447
  %2479 = vmatprep.subr.bf16.mxu0 0
  %2480 = vmatpush1.bf16.msra.mxu0 %v2448
  %2481 = vmatprep.subr.bf16.mxu0 0
  %2482 = vmatpush1.bf16.msra.mxu0 %v2449
  %2483 = vmatprep.subr.bf16.mxu0 0
  %2484 = vmatpush1.bf16.msra.mxu0 %v2450
  %2485 = vmatprep.subr.bf16.mxu0 0
  %2486 = vmatpush1.bf16.msra.mxu0 %v2451
  %2487 = vmatprep.subr.bf16.mxu0 0
  %2488 = vmatpush1.bf16.msra.mxu0 %v2452
  %2489 = vmatprep.subr.bf16.mxu0 0
  %2490 = vmatpush1.bf16.msra.mxu0 %v2453
  %2491 = vmatprep.subr.bf16.mxu0 0
  %2492 = vmatpush1.bf16.msra.mxu0 %v2454
  %2493 = vmatprep.subr.bf16.mxu0 0
  %2494 = vmatpush1.bf16.msra.mxu0 %v2455
  %2495 = vmatprep.mubr.bf16.mxu0 %v1227
  %2496 = vmatmul.mubr.bf16.gmra.mrb[0].mxu0 %v1226
  %v2497 = vpop.f32.mrb[0].mxu0
  %v2498 = vadd.f32 %v2461, %v2497
  %v2499 = vpop.f32.mrb[0].mxu0
  %v2500 = vpop.f32.mrb[0].mxu0
  %v2501 = vadd.f32 %v2461, %v2500
  %v2502 = vpop.f32.mrb[0].mxu0
  %2503 = vmatprep.mubr.bf16.mxu0 %v1229
  %2504 = vmatmul.mubr.bf16.gmra.mrb[0].mxu0 %v1228
  %v2505 = vpop.f32.mrb[0].mxu0
  %v2506 = vadd.f32 %v2461, %v2505
  %v2507 = vpop.f32.mrb[0].mxu0
  %v2508 = vpop.f32.mrb[0].mxu0
  %v2509 = vadd.f32 %v2461, %v2508
  %v2510 = vpop.f32.mrb[0].mxu0
  %2511 = vmatprep.mubr.bf16.mxu0 %v1231
  %2512 = vmatmul.mubr.bf16.gmra.mrb[0].mxu0 %v1230
  %v2513 = vpop.f32.mrb[0].mxu0
  %v2514 = vadd.f32 %v2461, %v2513
  %v2515 = vpop.f32.mrb[0].mxu0
  %v2516 = vpop.f32.mrb[0].mxu0
  %v2517 = vadd.f32 %v2461, %v2516
  %v2518 = vpop.f32.mrb[0].mxu0
  %2519 = vmatprep.mubr.bf16.mxu0 %v1233
  %2520 = vmatmul.mubr.bf16.gmra.mrb[0].mxu0 %v1232
  %v2521 = vpop.f32.mrb[0].mxu0
  %v2522 = vadd.f32 %v2461, %v2521
  %v2523 = vpop.f32.mrb[0].mxu0
  %v2524 = vpop.f32.mrb[0].mxu0
  %v2525 = vadd.f32 %v2461, %v2524
  %v2526 = vpop.f32.mrb[0].mxu0
  %2527 = vmatprep.mubr.bf16.mxu0 %v1235
  %2528 = vmatmul.mubr.bf16.gmra.mrb[0].mxu0 %v1234
  %v2529 = vpop.f32.mrb[0].mxu0
  %v2530 = vadd.f32 %v2461, %v2529
  %v2531 = vpop.f32.mrb[0].mxu0
  %v2532 = vpop.f32.mrb[0].mxu0
  %v2533 = vadd.f32 %v2461, %v2532
  %v2534 = vpop.f32.mrb[0].mxu0
  %2535 = vmatprep.mubr.bf16.mxu0 %v1237
  %2536 = vmatmul.mubr.bf16.gmra.mrb[0].mxu0 %v1236
  %v2537 = vpop.f32.mrb[0].mxu0
  %v2538 = vadd.f32 %v2461, %v2537
  %v2539 = vpop.f32.mrb[0].mxu0
  %v2540 = vpop.f32.mrb[0].mxu0
  %v2541 = vadd.f32 %v2461, %v2540
  %v2542 = vpop.f32.mrb[0].mxu0
  %2543 = vmatprep.mubr.bf16.mxu0 %v1239
  %2544 = vmatmul.mubr.bf16.gmra.mrb[0].mxu0 %v1238
  %v2545 = vpop.f32.mrb[0].mxu0
  %v2546 = vadd.f32 %v2461, %v2545
  %v2547 = vpop.f32.mrb[0].mxu0
  %v2548 = vpop.f32.mrb[0].mxu0
  %v2549 = vadd.f32 %v2461, %v2548
  %v2550 = vpop.f32.mrb[0].mxu0
  %2551 = vmatprep.mubr.bf16.mxu0 %v1241
  %2552 = vmatmul.mubr.bf16.gmra.mrb[0].mxu0 %v1240
  %v2553 = vpop.f32.mrb[0].mxu0
  %v2554 = vadd.f32 %v2461, %v2553
  %v2555 = vpop.f32.mrb[0].mxu0
  %v2556 = vpop.f32.mrb[0].mxu0
  %v2557 = vadd.f32 %v2461, %v2556
  %v2558 = vpop.f32.mrb[0].mxu0
  %2559 = vmatprep.mubr.bf16.mxu0 %v1243
  %2560 = vmatmul.mubr.bf16.gmra.mrb[0].mxu0 %v1242
  %v2561 = vpop.f32.mrb[0].mxu0
  %v2562 = vadd.f32 %v2461, %v2561
  %v2563 = vpop.f32.mrb[0].mxu0
  %v2564 = vpop.f32.mrb[0].mxu0
  %v2565 = vadd.f32 %v2461, %v2564
  %v2566 = vpop.f32.mrb[0].mxu0
  %2567 = vmatprep.mubr.bf16.mxu0 %v1245
  %2568 = vmatmul.mubr.bf16.gmra.mrb[0].mxu0 %v1244
  %v2569 = vpop.f32.mrb[0].mxu0
  %v2570 = vadd.f32 %v2461, %v2569
  %v2571 = vpop.f32.mrb[0].mxu0
  %v2572 = vpop.f32.mrb[0].mxu0
  %v2573 = vadd.f32 %v2461, %v2572
  %v2574 = vpop.f32.mrb[0].mxu0
  %2575 = vmatprep.mubr.bf16.mxu0 %v1247
  %2576 = vmatmul.mubr.bf16.gmra.mrb[0].mxu0 %v1246
  %v2577 = vpop.f32.mrb[0].mxu0
  %v2578 = vadd.f32 %v2461, %v2577
  %v2579 = vpop.f32.mrb[0].mxu0
  %v2580 = vpop.f32.mrb[0].mxu0
  %v2581 = vadd.f32 %v2461, %v2580
  %v2582 = vpop.f32.mrb[0].mxu0
  %2583 = vmatprep.mubr.bf16.mxu0 %v1249
  %2584 = vmatmul.mubr.bf16.gmra.mrb[0].mxu0 %v1248
  %v2585 = vpop.f32.mrb[0].mxu0
  %v2586 = vadd.f32 %v2461, %v2585
  %v2587 = vpop.f32.mrb[0].mxu0
  %v2588 = vpop.f32.mrb[0].mxu0
  %v2589 = vadd.f32 %v2461, %v2588
  %v2590 = vpop.f32.mrb[0].mxu0
  %2591 = vmatprep.mubr.bf16.mxu0 %v1251
  %2592 = vmatmul.mubr.bf16.gmra.mrb[0].mxu0 %v1250
  %v2593 = vpop.f32.mrb[0].mxu0
  %v2594 = vadd.f32 %v2461, %v2593
  %v2595 = vpop.f32.mrb[0].mxu0
  %v2596 = vpop.f32.mrb[0].mxu0
  %v2597 = vadd.f32 %v2461, %v2596
  %v2598 = vpop.f32.mrb[0].mxu0
  %2599 = vmatprep.mubr.bf16.mxu0 %v1253
  %2600 = vmatmul.mubr.bf16.gmra.mrb[0].mxu0 %v1252
  %v2601 = vpop.f32.mrb[0].mxu0
  %v2602 = vadd.f32 %v2461, %v2601
  %v2603 = vpop.f32.mrb[0].mxu0
  %v2604 = vpop.f32.mrb[0].mxu0
  %v2605 = vadd.f32 %v2461, %v2604
  %v2606 = vpop.f32.mrb[0].mxu0
  %2607 = vmatprep.mubr.bf16.mxu0 %v1255
  %2608 = vmatmul.mubr.bf16.gmra.mrb[0].mxu0 %v1254
  %v2609 = vpop.f32.mrb[0].mxu0
  %v2610 = vadd.f32 %v2461, %v2609
  %v2611 = vpop.f32.mrb[0].mxu0
  %v2612 = vpop.f32.mrb[0].mxu0
  %v2613 = vadd.f32 %v2461, %v2612
  %v2614 = vpop.f32.mrb[0].mxu0
  %2615 = vmatprep.mubr.bf16.mxu0 %v1257
  %2616 = vmatmul.mubr.bf16.gmra.mrb[0].mxu0 %v1256
  %v2617 = vpop.f32.mrb[0].mxu0
  %v2618 = vadd.f32 %v2461, %v2617
  %v2619 = vpop.f32.mrb[0].mxu0
  %v2620 = vpop.f32.mrb[0].mxu0
  %v2621 = vadd.f32 %v2461, %v2620
  %v2622 = vpop.f32.mrb[0].mxu0
  %2623 = vdwg.mxu0
  %v2624 = vmax.f32 %v2498, 0.0
  %v2625 = vmax.f32 %v2501, 0.0
  %v2626 = vmax.f32 %v2506, 0.0
  %v2627 = vmax.f32 %v2509, 0.0
  %v2628 = vmax.f32 %v2514, 0.0
  %v2629 = vmax.f32 %v2517, 0.0
  %v2630 = vmax.f32 %v2522, 0.0
  %v2631 = vmax.f32 %v2525, 0.0
  %v2632 = vmax.f32 %v2530, 0.0
  %v2633 = vmax.f32 %v2533, 0.0
  %v2634 = vmax.f32 %v2538, 0.0
  %v2635 = vmax.f32 %v2541, 0.0
  %v2636 = vmax.f32 %v2546, 0.0
  %v2637 = vmax.f32 %v2549, 0.0
  %v2638 = vmax.f32 %v2554, 0.0
  %v2639 = vmax.f32 %v2557, 0.0
  %v2640 = vmax.f32 %v2562, 0.0
  %v2641 = vmax.f32 %v2565, 0.0
  %v2642 = vmax.f32 %v2570, 0.0
  %v2643 = vmax.f32 %v2573, 0.0
  %v2644 = vmax.f32 %v2578, 0.0
  %v2645 = vmax.f32 %v2581, 0.0
  %v2646 = vmax.f32 %v2586, 0.0
  %v2647 = vmax.f32 %v2589, 0.0
  %v2648 = vmax.f32 %v2594, 0.0
  %v2649 = vmax.f32 %v2597, 0.0
  %v2650 = vmax.f32 %v2602, 0.0
  %v2651 = vmax.f32 %v2605, 0.0
  %v2652 = vmax.f32 %v2610, 0.0
  %v2653 = vmax.f32 %v2613, 0.0
  %v2654 = vmax.f32 %v2618, 0.0
  %v2655 = vmax.f32 %v2621, 0.0
  %v2656 = vld [vmem:[%s11] sm:$0x1]
  %v2658 = vlaneseq
  %v2659 = vshrl.u32 %v2658, 7
  %v2660 = vsub.s32 0, %v2659
  %v2661 = vrot.slane %v2656, %v2660
  %v2663 = vadd.f32 %v2624, %v2661
  %v2664 = vadd.f32 %v2625, %v2661
  %v2665 = vadd.f32 %v2626, %v2661
  %v2666 = vadd.f32 %v2627, %v2661
  %v2667 = vadd.f32 %v2628, %v2661
  %v2668 = vadd.f32 %v2629, %v2661
  %v2669 = vadd.f32 %v2630, %v2661
  %v2670 = vadd.f32 %v2631, %v2661
  %v2671 = vadd.f32 %v2632, %v2661
  %v2672 = vadd.f32 %v2633, %v2661
  %v2673 = vadd.f32 %v2634, %v2661
  %v2674 = vadd.f32 %v2635, %v2661
  %v2675 = vadd.f32 %v2636, %v2661
  %v2676 = vadd.f32 %v2637, %v2661
  %v2677 = vadd.f32 %v2638, %v2661
  %v2678 = vadd.f32 %v2639, %v2661
  %v2679 = vadd.f32 %v2640, %v2661
  %v2680 = vadd.f32 %v2641, %v2661
  %v2681 = vadd.f32 %v2642, %v2661
  %v2682 = vadd.f32 %v2643, %v2661
  %v2683 = vadd.f32 %v2644, %v2661
  %v2684 = vadd.f32 %v2645, %v2661
  %v2685 = vadd.f32 %v2646, %v2661
  %v2686 = vadd.f32 %v2647, %v2661
  %v2687 = vadd.f32 %v2648, %v2661
  %v2688 = vadd.f32 %v2649, %v2661
  %v2689 = vadd.f32 %v2650, %v2661
  %v2690 = vadd.f32 %v2651, %v2661
  %v2691 = vadd.f32 %v2652, %v2661
  %v2692 = vadd.f32 %v2653, %v2661
  %v2693 = vadd.f32 %v2654, %v2661
  %v2694 = vadd.f32 %v2655, %v2661
  %v2695 = vpack.c.bf16 %v2664, %v2663
  %v2696 = vpack.c.bf16 %v2666, %v2665
  %v2697 = vpack.c.bf16 %v2668, %v2667
  %v2698 = vpack.c.bf16 %v2670, %v2669
  %v2699 = vpack.c.bf16 %v2672, %v2671
  %v2700 = vpack.c.bf16 %v2674, %v2673
  %v2701 = vpack.c.bf16 %v2676, %v2675
  %v2702 = vpack.c.bf16 %v2678, %v2677
  %v2703 = vpack.c.bf16 %v2680, %v2679
  %v2704 = vpack.c.bf16 %v2682, %v2681
  %v2705 = vpack.c.bf16 %v2684, %v2683
  %v2706 = vpack.c.bf16 %v2686, %v2685
  %v2707 = vpack.c.bf16 %v2688, %v2687
  %v2708 = vpack.c.bf16 %v2690, %v2689
  %v2709 = vpack.c.bf16 %v2692, %v2691
  %v2710 = vpack.c.bf16 %v2694, %v2693
  %v2711 = vlaneseq
  %v2712 = vshrl.u32 %v2711, 7
  %v2713 = vld [vmem:[%s2] sm:$0x3]
  %v2714 = vlaneseq
  %v2715 = vshrl.u32 %v2714, 7
  %v2716 = vsub.s32 0, %v2715
  %v2717 = vrot.slane %v2713, %v2716
  %v2718 = vlaneseq
  %v2719 = vshrl.u32 %v2718, 7
  %v2720 = vsub.s32 1, %v2719
  %v2721 = vrot.slane %v2713, %v2720
  %vm2722 = vcmp.eq.s32.totalorder %v2712, %v2717
  %vm2723 = vcmp.eq.s32.totalorder %v2712, %v2721
  %v2724 = vsel %vm2722, 1.0, 0.0
  %v2725 = vsel %vm2723, 1.0, 0.0
  %v2726 = vpack.c.bf16 %v2724, %v2724
  %v2727 = vpack.c.bf16 %v2725, %v2725
  %2728 = vmatprep.subr.bf16.mxu0 0
  %2729 = vmatpush1.bf16.msra.mxu0 %v2695
  %2730 = vmatprep.subr.bf16.mxu0 0
  %2731 = vmatpush1.bf16.msra.mxu0 %v2696
  %2732 = vmatprep.subr.bf16.mxu0 0
  %2733 = vmatpush1.bf16.msra.mxu0 %v2697
  %2734 = vmatprep.subr.bf16.mxu0 0
  %2735 = vmatpush1.bf16.msra.mxu0 %v2698
  %2736 = vmatprep.subr.bf16.mxu0 0
  %2737 = vmatpush1.bf16.msra.mxu0 %v2699
  %2738 = vmatprep.subr.bf16.mxu0 0
  %2739 = vmatpush1.bf16.msra.mxu0 %v2700
  %2740 = vmatprep.subr.bf16.mxu0 0
  %2741 = vmatpush1.bf16.msra.mxu0 %v2701
  %2742 = vmatprep.subr.bf16.mxu0 0
  %2743 = vmatpush1.bf16.msra.mxu0 %v2702
  %2744 = vmatprep.subr.bf16.mxu0 0
  %2745 = vmatpush1.bf16.msra.mxu0 %v2703
  %2746 = vmatprep.subr.bf16.mxu0 0
  %2747 = vmatpush1.bf16.msra.mxu0 %v2704
  %2748 = vmatprep.subr.bf16.mxu0 0
  %2749 = vmatpush1.bf16.msra.mxu0 %v2705
  %2750 = vmatprep.subr.bf16.mxu0 0
  %2751 = vmatpush1.bf16.msra.mxu0 %v2706
  %2752 = vmatprep.subr.bf16.mxu0 0
  %2753 = vmatpush1.bf16.msra.mxu0 %v2707
  %2754 = vmatprep.subr.bf16.mxu0 0
  %2755 = vmatpush1.bf16.msra.mxu0 %v2708
  %2756 = vmatprep.subr.bf16.mxu0 0
  %2757 = vmatpush1.bf16.msra.mxu0 %v2709
  %2758 = vmatprep.subr.bf16.mxu0 0
  %2759 = vmatpush1.bf16.msra.mxu0 %v2710
  %2760 = vmatprep.mubr.bf16.mxu0 %v2727
  %2761 = vmatmul.mubr.bf16.gmra.mrb[0].mxu0 %v2726
  %v2762 = vpop.f32.mrb[0].mxu0
  %v2763 = vadd.f32 0.0, %v2762
  %v2764 = vpop.f32.mrb[0].mxu0
  %v2765 = vpop.f32.mrb[0].mxu0
  %v2766 = vpop.f32.mrb[0].mxu0
  %2767 = vdwg.mxu0
  %v2768 = vpack.c.bf16 %v2763, %v2763
  %v2769 = vld [vmem:[%s12] sm:$0xf]
  %v2770 = vld [vmem:[%s12 + $0x4] sm:$0xf]
  %v2771 = vld [vmem:[%s12 + $0x8] sm:$0xf]
  %v2772 = vld [vmem:[%s12 + $0xc] sm:$0xf]
  %v2773 = vld [vmem:[%s12 + $0x10] sm:$0xf]
  %v2774 = vld [vmem:[%s12 + $0x14] sm:$0xf]
  %v2775 = vld [vmem:[%s12 + $0x18] sm:$0xf]
  %v2776 = vld [vmem:[%s12 + $0x1c] sm:$0xf]
  %v2777 = vld [vmem:[%s12 + $0x20] sm:$0xf]
  %v2778 = vld [vmem:[%s12 + $0x24] sm:$0xf]
  %v2779 = vld [vmem:[%s12 + $0x28] sm:$0xf]
  %v2780 = vld [vmem:[%s12 + $0x2c] sm:$0xf]
  %v2781 = vld [vmem:[%s12 + $0x30] sm:$0xf]
  %v2782 = vld [vmem:[%s12 + $0x34] sm:$0xf]
  %v2783 = vld [vmem:[%s12 + $0x38] sm:$0xf]
  %v2784 = vld [vmem:[%s12 + $0x3c] sm:$0xf]
  %v2785 = vld [vmem:[%s13] sm:$0x1]
  %v2787 = vlaneseq
  %v2788 = vshrl.u32 %v2787, 7
  %v2789 = vsub.s32 0, %v2788
  %v2790 = vrot.slane %v2785, %v2789
  %v2808 = vunpack.c.l.b16 %v2769
  %v2809 = vunpack.c.l.b16 %v2770
  %v2810 = vunpack.c.l.b16 %v2771
  %v2811 = vunpack.c.l.b16 %v2772
  %v2812 = vunpack.c.l.b16 %v2773
  %v2813 = vunpack.c.l.b16 %v2774
  %v2814 = vunpack.c.l.b16 %v2775
  %v2815 = vunpack.c.l.b16 %v2776
  %v2816 = vunpack.c.l.b16 %v2777
  %v2817 = vunpack.c.l.b16 %v2778
  %v2818 = vunpack.c.l.b16 %v2779
  %v2819 = vunpack.c.l.b16 %v2780
  %v2820 = vunpack.c.l.b16 %v2781
  %v2821 = vunpack.c.l.b16 %v2782
  %v2822 = vunpack.c.l.b16 %v2783
  %v2823 = vunpack.c.l.b16 %v2784
  %v2824 = vpack.c.b16 %v2809, %v2808
  %v2825 = vpack.c.b16 %v2811, %v2810
  %v2826 = vpack.c.b16 %v2813, %v2812
  %v2827 = vpack.c.b16 %v2815, %v2814
  %v2828 = vpack.c.b16 %v2817, %v2816
  %v2829 = vpack.c.b16 %v2819, %v2818
  %v2830 = vpack.c.b16 %v2821, %v2820
  %v2831 = vpack.c.b16 %v2823, %v2822
  %2840 = vmatprep.subr.bf16.mxu0 0
  %2841 = vmatpush1.bf16.msra.mxu0 %v2824
  %2842 = vmatprep.subr.bf16.mxu0 0
  %2843 = vmatpush1.bf16.msra.mxu0 %v2825
  %2844 = vmatprep.subr.bf16.mxu0 0
  %2845 = vmatpush1.bf16.msra.mxu0 %v2826
  %2846 = vmatprep.subr.bf16.mxu0 0
  %2847 = vmatpush1.bf16.msra.mxu0 %v2827
  %2848 = vmatprep.subr.bf16.mxu0 0
  %2849 = vmatpush1.bf16.msra.mxu0 %v2828
  %2850 = vmatprep.subr.bf16.mxu0 0
  %2851 = vmatpush1.bf16.msra.mxu0 %v2829
  %2852 = vmatprep.subr.bf16.mxu0 0
  %2853 = vmatpush1.bf16.msra.mxu0 %v2830
  %2854 = vmatprep.subr.bf16.mxu0 0
  %2855 = vmatpush1.bf16.msra.mxu0 %v2831
  %2856 = vmatprep.subr.bf16.mxu0 0
  %2857 = vmatpush1.bf16.msra.mxu0 0
  %2858 = vmatprep.subr.bf16.mxu0 0
  %2859 = vmatpush1.bf16.msra.mxu0 0
  %2860 = vmatprep.subr.bf16.mxu0 0
  %2861 = vmatpush1.bf16.msra.mxu0 0
  %2862 = vmatprep.subr.bf16.mxu0 0
  %2863 = vmatpush1.bf16.msra.mxu0 0
  %2864 = vmatprep.subr.bf16.mxu0 0
  %2865 = vmatpush1.bf16.msra.mxu0 0
  %2866 = vmatprep.subr.bf16.mxu0 0
  %2867 = vmatpush1.bf16.msra.mxu0 0
  %2868 = vmatprep.subr.bf16.mxu0 0
  %2869 = vmatpush1.bf16.msra.mxu0 0
  %2870 = vmatprep.subr.bf16.mxu0 0
  %2871 = vmatpush1.bf16.msra.mxu0 0
  %2872 = vmatprep.mubr.bf16.mxu0 0
  %2873 = vmatmul.mubr.bf16.gmra.mrb[0].mxu0 %v2768
  %v2874 = vpop.f32.mrb[0].mxu0
  %v2875 = vadd.f32 %v2790, %v2874
  %v2876 = vpop.f32.mrb[0].mxu0
  %v2877 = vpop.f32.mrb[0].mxu0
  %v2878 = vpop.f32.mrb[0].mxu0
  %2879 = vdwg.mxu0
  %v2880 = vmax.f32 %v2875, 0.0
  %v2881 = vpack.c.bf16 %v2880, %v2880
  %v2882 = vld [vmem:[%s14] sm:$0xf]
  %v2883 = vld [vmem:[%s14 + $0x4] sm:$0xf]
  %v2884 = vld [vmem:[%s14 + $0x8] sm:$0xf]
  %v2885 = vld [vmem:[%s14 + $0xc] sm:$0xf]
  %v2886 = vld [vmem:[%s14 + $0x10] sm:$0xf]
  %v2887 = vld [vmem:[%s14 + $0x14] sm:$0xf]
  %v2888 = vld [vmem:[%s14 + $0x18] sm:$0xf]
  %v2889 = vld [vmem:[%s14 + $0x1c] sm:$0xf]
  %v2890 = vld [vmem:[%s14 + $0x20] sm:$0xf]
  %v2891 = vld [vmem:[%s14 + $0x24] sm:$0xf]
  %v2892 = vld [vmem:[%s14 + $0x28] sm:$0xf]
  %v2893 = vld [vmem:[%s14 + $0x2c] sm:$0xf]
  %v2894 = vld [vmem:[%s14 + $0x30] sm:$0xf]
  %v2895 = vld [vmem:[%s14 + $0x34] sm:$0xf]
  %v2896 = vld [vmem:[%s14 + $0x38] sm:$0xf]
  %v2897 = vld [vmem:[%s14 + $0x3c] sm:$0xf]
  %v2898 = vld [vmem:[%s15] sm:$0x1]
  %v2900 = vlaneseq
  %v2901 = vshrl.u32 %v2900, 7
  %v2902 = vsub.s32 0, %v2901
  %v2903 = vrot.slane %v2898, %v2902
  %v2921 = vunpack.c.l.b16 %v2882
  %v2922 = vunpack.c.l.b16 %v2883
  %v2923 = vunpack.c.l.b16 %v2884
  %v2924 = vunpack.c.l.b16 %v2885
  %v2925 = vunpack.c.l.b16 %v2886
  %v2926 = vunpack.c.l.b16 %v2887
  %v2927 = vunpack.c.l.b16 %v2888
  %v2928 = vunpack.c.l.b16 %v2889
  %v2929 = vunpack.c.l.b16 %v2890
  %v2930 = vunpack.c.l.b16 %v2891
  %v2931 = vunpack.c.l.b16 %v2892
  %v2932 = vunpack.c.l.b16 %v2893
  %v2933 = vunpack.c.l.b16 %v2894
  %v2934 = vunpack.c.l.b16 %v2895
  %v2935 = vunpack.c.l.b16 %v2896
  %v2936 = vunpack.c.l.b16 %v2897
  %v2937 = vpack.c.b16 %v2922, %v2921
  %v2938 = vpack.c.b16 %v2924, %v2923
  %v2939 = vpack.c.b16 %v2926, %v2925
  %v2940 = vpack.c.b16 %v2928, %v2927
  %v2941 = vpack.c.b16 %v2930, %v2929
  %v2942 = vpack.c.b16 %v2932, %v2931
  %v2943 = vpack.c.b16 %v2934, %v2933
  %v2944 = vpack.c.b16 %v2936, %v2935
  %2953 = vmatprep.subr.bf16.mxu0 0
  %2954 = vmatpush1.bf16.msra.mxu0 %v2937
  %2955 = vmatprep.subr.bf16.mxu0 0
  %2956 = vmatpush1.bf16.msra.mxu0 %v2938
  %2957 = vmatprep.subr.bf16.mxu0 0
  %2958 = vmatpush1.bf16.msra.mxu0 %v2939
  %2959 = vmatprep.subr.bf16.mxu0 0
  %2960 = vmatpush1.bf16.msra.mxu0 %v2940
  %2961 = vmatprep.subr.bf16.mxu0 0
  %2962 = vmatpush1.bf16.msra.mxu0 %v2941
  %2963 = vmatprep.subr.bf16.mxu0 0
  %2964 = vmatpush1.bf16.msra.mxu0 %v2942
  %2965 = vmatprep.subr.bf16.mxu0 0
  %2966 = vmatpush1.bf16.msra.mxu0 %v2943
  %2967 = vmatprep.subr.bf16.mxu0 0
  %2968 = vmatpush1.bf16.msra.mxu0 %v2944
  %2969 = vmatprep.subr.bf16.mxu0 0
  %2970 = vmatpush1.bf16.msra.mxu0 0
  %2971 = vmatprep.subr.bf16.mxu0 0
  %2972 = vmatpush1.bf16.msra.mxu0 0
  %2973 = vmatprep.subr.bf16.mxu0 0
  %2974 = vmatpush1.bf16.msra.mxu0 0
  %2975 = vmatprep.subr.bf16.mxu0 0
  %2976 = vmatpush1.bf16.msra.mxu0 0
  %2977 = vmatprep.subr.bf16.mxu0 0
  %2978 = vmatpush1.bf16.msra.mxu0 0
  %2979 = vmatprep.subr.bf16.mxu0 0
  %2980 = vmatpush1.bf16.msra.mxu0 0
  %2981 = vmatprep.subr.bf16.mxu0 0
  %2982 = vmatpush1.bf16.msra.mxu0 0
  %2983 = vmatprep.subr.bf16.mxu0 0
  %2984 = vmatpush1.bf16.msra.mxu0 0
  %2985 = vmatprep.mubr.bf16.mxu0 0
  %2986 = vmatmul.mubr.bf16.gmra.mrb[0].mxu0 %v2881
  %v2987 = vpop.f32.mrb[0].mxu0
  %v2988 = vadd.f32 %v2903, %v2987
  %v2989 = vpop.f32.mrb[0].mxu0
  %v2990 = vpop.f32.mrb[0].mxu0
  %v2991 = vpop.f32.mrb[0].mxu0
  %2992 = vdwg.mxu0
  %v2993 = vmax.f32 %v2988, 0.0
  %v2994 = vpack.c.bf16 %v2993, %v2993
  %v2995 = vld [vmem:[%s16] sm:$0xf]
  %v2996 = vld [vmem:[%s16 + $0x4] sm:$0xf]
  %v2997 = vld [vmem:[%s16 + $0x8] sm:$0xf]
  %v2998 = vld [vmem:[%s16 + $0xc] sm:$0xf]
  %v2999 = vld [vmem:[%s16 + $0x10] sm:$0xf]
  %v3000 = vld [vmem:[%s16 + $0x14] sm:$0xf]
  %v3001 = vld [vmem:[%s16 + $0x18] sm:$0xf]
  %v3002 = vld [vmem:[%s16 + $0x1c] sm:$0xf]
  %v3003 = vld [vmem:[%s16 + $0x20] sm:$0xf]
  %v3004 = vld [vmem:[%s16 + $0x24] sm:$0xf]
  %v3005 = vld [vmem:[%s16 + $0x28] sm:$0xf]
  %v3006 = vld [vmem:[%s16 + $0x2c] sm:$0xf]
  %v3007 = vld [vmem:[%s16 + $0x30] sm:$0xf]
  %v3008 = vld [vmem:[%s16 + $0x34] sm:$0xf]
  %v3009 = vld [vmem:[%s16 + $0x38] sm:$0xf]
  %v3010 = vld [vmem:[%s16 + $0x3c] sm:$0xf]
  %v3011 = vld [vmem:[%s17] sm:$0x1]
  %v3013 = vlaneseq
  %v3014 = vshrl.u32 %v3013, 7
  %v3015 = vsub.s32 0, %v3014
  %v3016 = vrot.slane %v3011, %v3015
  %v3034 = vunpack.c.l.b16 %v2995
  %v3035 = vunpack.c.l.b16 %v2996
  %v3036 = vunpack.c.l.b16 %v2997
  %v3037 = vunpack.c.l.b16 %v2998
  %v3038 = vunpack.c.l.b16 %v2999
  %v3039 = vunpack.c.l.b16 %v3000
  %v3040 = vunpack.c.l.b16 %v3001
  %v3041 = vunpack.c.l.b16 %v3002
  %v3042 = vunpack.c.l.b16 %v3003
  %v3043 = vunpack.c.l.b16 %v3004
  %v3044 = vunpack.c.l.b16 %v3005
  %v3045 = vunpack.c.l.b16 %v3006
  %v3046 = vunpack.c.l.b16 %v3007
  %v3047 = vunpack.c.l.b16 %v3008
  %v3048 = vunpack.c.l.b16 %v3009
  %v3049 = vunpack.c.l.b16 %v3010
  %v3050 = vpack.c.b16 %v3035, %v3034
  %v3051 = vpack.c.b16 %v3037, %v3036
  %v3052 = vpack.c.b16 %v3039, %v3038
  %v3053 = vpack.c.b16 %v3041, %v3040
  %v3054 = vpack.c.b16 %v3043, %v3042
  %v3055 = vpack.c.b16 %v3045, %v3044
  %v3056 = vpack.c.b16 %v3047, %v3046
  %v3057 = vpack.c.b16 %v3049, %v3048
  %3066 = vmatprep.subr.bf16.mxu0 0
  %3067 = vmatpush1.bf16.msra.mxu0 %v3050
  %3068 = vmatprep.subr.bf16.mxu0 0
  %3069 = vmatpush1.bf16.msra.mxu0 %v3051
  %3070 = vmatprep.subr.bf16.mxu0 0
  %3071 = vmatpush1.bf16.msra.mxu0 %v3052
  %3072 = vmatprep.subr.bf16.mxu0 0
  %3073 = vmatpush1.bf16.msra.mxu0 %v3053
  %3074 = vmatprep.subr.bf16.mxu0 0
  %3075 = vmatpush1.bf16.msra.mxu0 %v3054
  %3076 = vmatprep.subr.bf16.mxu0 0
  %3077 = vmatpush1.bf16.msra.mxu0 %v3055
  %3078 = vmatprep.subr.bf16.mxu0 0
  %3079 = vmatpush1.bf16.msra.mxu0 %v3056
  %3080 = vmatprep.subr.bf16.mxu0 0
  %3081 = vmatpush1.bf16.msra.mxu0 %v3057
  %3082 = vmatprep.subr.bf16.mxu0 0
  %3083 = vmatpush1.bf16.msra.mxu0 0
  %3084 = vmatprep.subr.bf16.mxu0 0
  %3085 = vmatpush1.bf16.msra.mxu0 0
  %3086 = vmatprep.subr.bf16.mxu0 0
  %3087 = vmatpush1.bf16.msra.mxu0 0
  %3088 = vmatprep.subr.bf16.mxu0 0
  %3089 = vmatpush1.bf16.msra.mxu0 0
  %3090 = vmatprep.subr.bf16.mxu0 0
  %3091 = vmatpush1.bf16.msra.mxu0 0
  %3092 = vmatprep.subr.bf16.mxu0 0
  %3093 = vmatpush1.bf16.msra.mxu0 0
  %3094 = vmatprep.subr.bf16.mxu0 0
  %3095 = vmatpush1.bf16.msra.mxu0 0
  %3096 = vmatprep.subr.bf16.mxu0 0
  %3097 = vmatpush1.bf16.msra.mxu0 0
  %3098 = vmatprep.mubr.bf16.mxu0 0
  %3099 = vmatmul.mubr.bf16.gmra.mrb[0].mxu0 %v2994
  %v3100 = vpop.f32.mrb[0].mxu0
  %v3101 = vadd.f32 %v3016, %v3100
  %v3102 = vpop.f32.mrb[0].mxu0
  %v3103 = vpop.f32.mrb[0].mxu0
  %v3104 = vpop.f32.mrb[0].mxu0
  %3105 = vdwg.mxu0
  %v3106 = vmax.f32 %v3101, 0.0
  %3107 = vst [vmem:[%s18] sm:$0xff] %v3106
  // Predicated region
  $region74: #{gcn_forward.1} parent=0 // pred_check
    _
  $region75: #{gcn_forward.1} parent=0 // pred_check_branch
    %3109 = sbr.rel (0) target = $region77
  $region76: #{gcn_forward.1} parent=0 // pred_region
    _
  $region77: #{gcn_forward.1} parent=0 // pred_fallthru
    _
  // Predicated region
  $region78: #{gcn_forward.1} parent=0 // pred_check
    _
  $region79: #{gcn_forward.1} parent=0 // pred_check_branch
    %3111 = sbr.rel (0) target = $region81
  $region80: #{gcn_forward.1} parent=0 // pred_region
    _
  $region81: #{gcn_forward.1} parent=0 // pred_fallthru
    _

</llo_original>
